<compile_context>
chip_gen: v5e
topology: v5e:2x2
jax: 0.10.0
libtpu: 0.0.40
codegen_flags: <defaults>
</compile_context>

<pallas_src>
import functools

import jax
import jax.numpy as jnp
from jax.experimental import pallas as pl
from jax.experimental.pallas import tpu as pltpu


def _round_up(a, b):
    return (a + b - 1) // b * b


_N_BOX_PAD = 128  # lane-dense width of the packed (obj_box | sub_box) columns

# Cache: does this JAX build accept pl.Buffered(1) on grid-invariant inputs?
_SINGLE_BUFFER_WEIGHTS_OK = None


def _vmem_capacity_bytes():
    try:
        return int(pltpu.get_tpu_info().vmem_capacity_bytes)
    except Exception:
        return 64 << 20  # conservative default (v7x per-TC VMEM)


def relation_header_kernel(
    x_ref,
    w1_ref, b1_ref,            # fused layer-1 / classification weights
    ow2_ref, ob2_ref,          # obj bbox MLP layer 2
    sw2_ref, sb2_ref,          # sub bbox MLP layer 2
    w3a_ref, w3b_ref, b3_ref,  # fused (lane-padded) layer 3
    out_ref,                   # [cls_pad class logits | 128 packed boxes]
    *, d_pad, cls_pad,
):
    cdt = w1_ref.dtype
    x = x_ref[...]

    # Fused shared-x GEMM.  Column layout of h1 (all offsets 128-aligned):
    #   [0, d_pad)              obj-bbox MLP layer-1 pre-act (+ zero pad)
    #   [d_pad, 2*d_pad)        sub-bbox MLP layer-1 pre-act (+ zero pad)
    #   [2*d_pad, 2*d_pad+cls_pad)  obj | sub | rel class logits (+ zero pad)
    h1 = jnp.dot(x, w1_ref[...], preferred_element_type=jnp.float32) + b1_ref[...]

    # Class logits written as one lane-dense, 128-aligned slab.
    out_ref[:, 0:cls_pad] = h1[:, 2 * d_pad:]

    obj_h = jnp.maximum(h1[:, 0:d_pad], 0.0)
    sub_h = jnp.maximum(h1[:, d_pad:2 * d_pad], 0.0)

    # Bbox MLP layer 2 (ReLU).  Padded weight rows/cols are zero, so the
    # extra lanes stay exactly zero and never affect the real outputs.
    obj_h = jnp.maximum(
        jnp.dot(obj_h.astype(cdt), ow2_ref[...],
                preferred_element_type=jnp.float32) + ob2_ref[...], 0.0)
    sub_h = jnp.maximum(
        jnp.dot(sub_h.astype(cdt), sw2_ref[...],
                preferred_element_type=jnp.float32) + sb2_ref[...], 0.0)

    # Fused layer 3: w3a holds ow3 in cols 0:4, w3b holds sw3 in cols 4:8.
    box_pre = (jnp.dot(obj_h.astype(cdt), w3a_ref[...],
                       preferred_element_type=jnp.float32)
               + jnp.dot(sub_h.astype(cdt), w3b_ref[...],
                         preferred_element_type=jnp.float32)
               + b3_ref[...])
    out_ref[:, cls_pad:] = jax.nn.sigmoid(box_pre)


def _pallas_forward(x, weight_args, *, tm_eff, d_model, d_pad, cls_pad,
                    compute_dtype, single_buffer_weights):
    M_pad = x.shape[0]
    N1_pad = weight_args[0].shape[1]
    n_out = cls_pad + _N_BOX_PAD
    grid = (M_pad // tm_eff,)

    pipeline_mode = pl.Buffered(1) if single_buffer_weights else None

    def full_spec(arr):
        # Small weight/bias tensors stay resident in VMEM (constant index map).
        if pipeline_mode is None:
            return pl.BlockSpec(arr.shape, lambda i: (0, 0))
        return pl.BlockSpec(arr.shape, lambda i: (0, 0),
                            pipeline_mode=pipeline_mode)

    x_spec = pl.BlockSpec((tm_eff, d_model), lambda i: (i, 0))
    out_spec = pl.BlockSpec((tm_eff, n_out), lambda i: (i, 0))
    out_shape = jax.ShapeDtypeStruct((M_pad, n_out), jnp.float32)

    # --- generation-aware VMEM budget (weights + IO tiles + live temps) ---
    itemsize = jnp.dtype(compute_dtype).itemsize
    weight_bytes = sum(int(a.size) * a.dtype.itemsize for a in weight_args)
    weight_bufs = 1 if single_buffer_weights else 2
    io_bytes = 2 * tm_eff * d_model * itemsize + 2 * tm_eff * n_out * 4
    temp_bytes = tm_eff * (N1_pad * 4 + 2 * d_pad * (4 + itemsize)
                           + _N_BOX_PAD * 4)
    needed = weight_bufs * weight_bytes + io_bytes + temp_bytes
    cap = min(100 << 20, int(0.85 * _vmem_capacity_bytes()))
    vmem_limit = int(min(cap, max(32 << 20, 2 * needed)))

    flops = 2 * M_pad * (d_model * N1_pad
                         + 2 * d_pad * d_pad
                         + 2 * d_pad * _N_BOX_PAD)
    bytes_accessed = (int(x.size) * x.dtype.itemsize + weight_bytes
                      + M_pad * n_out * 4)
    cost = pl.CostEstimate(flops=flops, transcendentals=M_pad * _N_BOX_PAD,
                           bytes_accessed=bytes_accessed)

    kernel = functools.partial(relation_header_kernel,
                               d_pad=d_pad, cls_pad=cls_pad)

    return pl.pallas_call(
        kernel,
        out_shape=out_shape,
        grid_spec=pltpu.PrefetchScalarGridSpec(
            num_scalar_prefetch=0,
            grid=grid,
            in_specs=[x_spec] + [full_spec(a) for a in weight_args],
            out_specs=out_spec,
        ),
        compiler_params=pltpu.CompilerParams(
            dimension_semantics=("parallel",),
            vmem_limit_bytes=vmem_limit,
        ),
        cost_estimate=cost,
    )(x, *weight_args)


def relation_header_forward(relation_features, params, *, tm=512,
                            compute_dtype=jnp.bfloat16):
    """relation_features: (batch, seq, d_model) float32."""
    global _SINGLE_BUFFER_WEIGHTS_OK

    batch, seq, d_model = relation_features.shape
    M = batch * seq
    n_obj = params["obj_w"].shape[1]
    n_rel = params["rel_w"].shape[1]
    n_cls_total = 2 * n_obj + n_rel

    # --- lane-aligned fused column layout --------------------------------
    d_pad = _round_up(d_model, 128)
    cls_pad = _round_up(n_cls_total, 128)
    N1_pad = 2 * d_pad + cls_pad

    # --- row tiling: sublane granularity depends on compute dtype --------
    itemsize = jnp.dtype(compute_dtype).itemsize
    row_gran = max(8, 32 // itemsize)          # f32 -> 8 rows, bf16 -> 16
    tm_eff = _round_up(min(int(tm), _round_up(M, row_gran)), row_gran)
    # Keep at least 2 grid steps whenever there is enough work so both v7x
    # TensorCores (sharded over the "parallel" axis) get used.
    if _round_up(M, row_gran) >= 2 * row_gran:
        tm_eff = min(tm_eff, _round_up(pl.cdiv(M, 2), row_gran))
    M_pad = _round_up(M, tm_eff)

    x = relation_features.reshape(M, d_model).astype(compute_dtype)
    if M_pad != M:
        x = jnp.pad(x, ((0, M_pad - M), (0, 0)))

    def pad_cols(a, width):
        return jnp.pad(a, ((0, 0), (0, width - a.shape[1])))

    def pad_2d(a, rows, cols, col_start=0):
        return jnp.pad(a, ((0, rows - a.shape[0]),
                           (col_start, cols - col_start - a.shape[1])))

    # Fused layer-1 / classification weights; each segment 128-lane aligned.
    cls_w = jnp.concatenate(
        [params["obj_w"], params["sub_w"], params["rel_w"]], axis=1)
    cls_b = jnp.concatenate(
        [params["obj_b"], params["sub_b"], params["rel_b"]], axis=1)
    w1 = jnp.concatenate([pad_cols(params["ow1"], d_pad),
                          pad_cols(params["sw1"], d_pad),
                          pad_cols(cls_w, cls_pad)], axis=1)
    b1 = jnp.concatenate([pad_cols(params["ob1"], d_pad),
                          pad_cols(params["sb1"], d_pad),
                          pad_cols(cls_b, cls_pad)], axis=1)

    # Bbox layer-2 weights padded to (d_pad, d_pad); padded rows/cols are 0.
    ow2 = pad_2d(params["ow2"], d_pad, d_pad)
    sw2 = pad_2d(params["sw2"], d_pad, d_pad)
    ob2 = pad_cols(params["ob2"], d_pad)
    sb2 = pad_cols(params["sb2"], d_pad)

    # Fused layer-3: obj box in cols 0:4, sub box in cols 4:8 of a 128 slab.
    w3a = pad_2d(params["ow3"], d_pad, _N_BOX_PAD, col_start=0)
    w3b = pad_2d(params["sw3"], d_pad, _N_BOX_PAD, col_start=4)
    b3 = pad_cols(jnp.concatenate([params["ob3"], params["sb3"]], axis=1),
                  _N_BOX_PAD)

    # Weight matrices in compute dtype (bf16 default); biases + acc in f32.
    w1 = w1.astype(compute_dtype)
    ow2 = ow2.astype(compute_dtype)
    sw2 = sw2.astype(compute_dtype)
    w3a = w3a.astype(compute_dtype)
    w3b = w3b.astype(compute_dtype)
    b1 = b1.astype(jnp.float32)
    ob2 = ob2.astype(jnp.float32)
    sb2 = sb2.astype(jnp.float32)
    b3 = b3.astype(jnp.float32)

    weight_args = [w1, b1, ow2, ob2, sw2, sb2, w3a, w3b, b3]

    run = functools.partial(
        _pallas_forward, x, weight_args, tm_eff=tm_eff, d_model=d_model,
        d_pad=d_pad, cls_pad=cls_pad, compute_dtype=compute_dtype)

    out = None
    if _SINGLE_BUFFER_WEIGHTS_OK is not False:
        try:
            out = jax.block_until_ready(run(single_buffer_weights=True))
            _SINGLE_BUFFER_WEIGHTS_OK = True
        except Exception:
            # This JAX build rejects pl.Buffered(1); fall back to defaults.
            _SINGLE_BUFFER_WEIGHTS_OK = False
    if out is None:
        out = run(single_buffer_weights=False)

    out = out[:M]
    obj_cls = out[:, 0:n_obj]
    sub_cls = out[:, n_obj:2 * n_obj]
    rel_cls = out[:, 2 * n_obj:2 * n_obj + n_rel]
    obj_box = out[:, cls_pad:cls_pad + 4]
    sub_box = out[:, cls_pad + 4:cls_pad + 8]

    return {
        "relation_obj_cls_logits": obj_cls.reshape(batch, seq, n_obj),
        "relation_sub_cls_logits": sub_cls.reshape(batch, seq, n_obj),
        "relation_rel_cls_logits": rel_cls.reshape(batch, seq, n_rel),
        "relation_obj_box_coords": obj_box.reshape(batch, seq, 4),
        "relation_sub_box_coords": sub_box.reshape(batch, seq, 4),
    }


def init_params(key, d_model, num_obj_classes, num_rel_classes):
    """Deterministic synthetic parameters (nn.Linear weights stored
    transposed as (in, out) for x @ W)."""
    n_obj = num_obj_classes + 1
    n_rel = num_rel_classes + 1

    def lin(key, fan_in, fan_out):
        kw, kb = jax.random.split(key)
        bound = 1.0 / jnp.sqrt(fan_in)
        w = jax.random.uniform(kw, (fan_in, fan_out), jnp.float32, -bound, bound)
        b = jax.random.uniform(kb, (1, fan_out), jnp.float32, -bound, bound)
        return w, b

    keys = jax.random.split(key, 9)
    p = {}
    p["obj_w"], p["obj_b"] = lin(keys[0], d_model, n_obj)
    p["sub_w"], p["sub_b"] = lin(keys[1], d_model, n_obj)
    p["rel_w"], p["rel_b"] = lin(keys[2], d_model, n_rel)
    p["ow1"], p["ob1"] = lin(keys[3], d_model, d_model)
    p["ow2"], p["ob2"] = lin(keys[4], d_model, d_model)
    p["ow3"], p["ob3"] = lin(keys[5], d_model, 4)
    p["sw1"], p["sb1"] = lin(keys[6], d_model, d_model)
    p["sw2"], p["sb2"] = lin(keys[7], d_model, d_model)
    p["sw3"], p["sb3"] = lin(keys[8], d_model, 4)
    return p


def reference_forward(x, p):
    """Plain-JAX reference (mirrors the PyTorch module)."""
    def lin(h, w, b):
        return h @ w + b

    def mlp3(h, w1, b1, w2, b2, w3, b3):
        h = jax.nn.relu(lin(h, w1, b1))
        h = jax.nn.relu(lin(h, w2, b2))
        return lin(h, w3, b3)

    return {
        "relation_obj_cls_logits": lin(x, p["obj_w"], p["obj_b"]),
        "relation_sub_cls_logits": lin(x, p["sub_w"], p["sub_b"]),
        "relation_rel_cls_logits": lin(x, p["rel_w"], p["rel_b"]),
        "relation_obj_box_coords": jax.nn.sigmoid(
            mlp3(x, p["ow1"], p["ob1"], p["ow2"], p["ob2"], p["ow3"], p["ob3"])),
        "relation_sub_box_coords": jax.nn.sigmoid(
            mlp3(x, p["sw1"], p["sb1"], p["sw2"], p["sb2"], p["sw3"], p["sb3"])),
    }


if __name__ == "__main__":
    batch, seq, d_model = 2, 8, 32
    num_obj_classes, num_rel_classes = 4, 3

    key = jax.random.PRNGKey(0)
    k_x, k_p = jax.random.split(key)
    relation_features = jax.random.normal(k_x, (batch, seq, d_model), jnp.float32)
    params = init_params(k_p, d_model, num_obj_classes, num_rel_classes)

    refs = reference_forward(relation_features, params)

    # f32 parity mode: tight agreement with the plain-JAX reference.
    outs_f32 = relation_header_forward(relation_features, params,
                                       compute_dtype=jnp.float32)
    outs_f32 = jax.tree_util.tree_map(jax.block_until_ready, outs_f32)
    for name, val in outs_f32.items():
        ref = refs[name]
        assert val.shape == ref.shape, (name, val.shape, ref.shape)
        assert jnp.allclose(val, ref, atol=1e-5, rtol=1e-5), name

    # Default bf16 compute path (f32 accumulation) — looser tolerance.
    outs_bf16 = relation_header_forward(relation_features, params)
    outs_bf16 = jax.tree_util.tree_map(jax.block_until_ready, outs_bf16)
    for name, val in outs_bf16.items():
        ref = refs[name]
        assert val.shape == ref.shape, (name, val.shape, ref.shape)
        assert jnp.allclose(val, ref, atol=1e-1, rtol=1e-1), name

    print("KERNEL_OK")
</pallas_src>

<mosaic_0001>
module attributes {stable_mosaic.version = 11 : i64} {
  func.func @relation_header_kernel(%arg0: i32, %arg1: memref<8x32xf32, #tpu.memory_space<vmem>>, %arg2: memref<32x384xf32, #tpu.memory_space<vmem>>, %arg3: memref<1x384xf32, #tpu.memory_space<vmem>>, %arg4: memref<128x128xf32, #tpu.memory_space<vmem>>, %arg5: memref<1x128xf32, #tpu.memory_space<vmem>>, %arg6: memref<128x128xf32, #tpu.memory_space<vmem>>, %arg7: memref<1x128xf32, #tpu.memory_space<vmem>>, %arg8: memref<128x128xf32, #tpu.memory_space<vmem>>, %arg9: memref<128x128xf32, #tpu.memory_space<vmem>>, %arg10: memref<1x128xf32, #tpu.memory_space<vmem>>, %arg11: memref<8x256xf32, #tpu.memory_space<vmem>>) attributes {dimension_semantics = [#tpu.dimension_semantics<parallel>], iteration_bounds = array<i64: 2>, scalar_prefetch = 0 : i64, scratch_operands = 0 : i64, tpu.core_type = #tpu.core_type<tc>, window_params = [{transform_indices = @transform_0, window_bounds = array<i64: 8, 32>}, {pipeline_mode = #tpu.pipeline_mode<synchronous>, transform_indices = @transform_1, window_bounds = array<i64: 32, 384>}, {pipeline_mode = #tpu.pipeline_mode<synchronous>, transform_indices = @transform_2, window_bounds = array<i64: 1, 384>}, {pipeline_mode = #tpu.pipeline_mode<synchronous>, transform_indices = @transform_3, window_bounds = array<i64: 128, 128>}, {pipeline_mode = #tpu.pipeline_mode<synchronous>, transform_indices = @transform_4, window_bounds = array<i64: 1, 128>}, {pipeline_mode = #tpu.pipeline_mode<synchronous>, transform_indices = @transform_5, window_bounds = array<i64: 128, 128>}, {pipeline_mode = #tpu.pipeline_mode<synchronous>, transform_indices = @transform_6, window_bounds = array<i64: 1, 128>}, {pipeline_mode = #tpu.pipeline_mode<synchronous>, transform_indices = @transform_7, window_bounds = array<i64: 128, 128>}, {pipeline_mode = #tpu.pipeline_mode<synchronous>, transform_indices = @transform_8, window_bounds = array<i64: 128, 128>}, {pipeline_mode = #tpu.pipeline_mode<synchronous>, transform_indices = @transform_9, window_bounds = array<i64: 1, 128>}, {transform_indices = @transform_10, window_bounds = array<i64: 8, 256>}]} {
    %c0 = arith.constant 0 : index
    %c0_0 = arith.constant 0 : index
    %0 = vector.load %arg1[%c0, %c0_0] : memref<8x32xf32, #tpu.memory_space<vmem>>, vector<8x32xf32>
    %c0_1 = arith.constant 0 : index
    %c0_2 = arith.constant 0 : index
    %1 = vector.load %arg2[%c0_1, %c0_2] : memref<32x384xf32, #tpu.memory_space<vmem>>, vector<32x384xf32>
    %cst = arith.constant dense<0.000000e+00> : vector<8x384xf32>
    %2 = tpu.matmul %0, %1, %cst {dimension_numbers = #tpu.dot_dimension_numbers<[1], [0], [0], [1], [0, 0, 1, 1], [], []>} : vector<8x32xf32>, vector<32x384xf32>, vector<8x384xf32> -> vector<8x384xf32>
    %c0_3 = arith.constant 0 : index
    %c0_4 = arith.constant 0 : index
    %3 = vector.load %arg3[%c0_3, %c0_4] : memref<1x384xf32, #tpu.memory_space<vmem>>, vector<1x384xf32>
    %4 = vector.broadcast %3 : vector<1x384xf32> to vector<8x384xf32>
    %5 = arith.addf %2, %4 : vector<8x384xf32>
    %6 = vector.extract_strided_slice %5 {offsets = [0, 256], sizes = [8, 128], strides = [1, 1]} : vector<8x384xf32> to vector<8x128xf32>
    %c0_5 = arith.constant 0 : index
    %c0_6 = arith.constant 0 : index
    %7 = vector.load %arg11[%c0_5, %c0_6] : memref<8x256xf32, #tpu.memory_space<vmem>>, vector<8x128xf32>
    tpu.vector_store %arg11[%c0_5, %c0_6], %6 {strides = array<i32>} : memref<8x256xf32, #tpu.memory_space<vmem>>, vector<8x128xf32>,
    %8 = vector.extract_strided_slice %5 {offsets = [0, 0], sizes = [8, 128], strides = [1, 1]} : vector<8x384xf32> to vector<8x128xf32>
    %cst_7 = arith.constant 0.000000e+00 : f32
    %9 = vector.broadcast %cst_7 : f32 to vector<8x128xf32>
    %10 = arith.maximumf %8, %9 : vector<8x128xf32>
    %11 = vector.extract_strided_slice %5 {offsets = [0, 128], sizes = [8, 128], strides = [1, 1]} : vector<8x384xf32> to vector<8x128xf32>
    %cst_8 = arith.constant 0.000000e+00 : f32
    %12 = vector.broadcast %cst_8 : f32 to vector<8x128xf32>
    %13 = arith.maximumf %11, %12 : vector<8x128xf32>
    %c0_9 = arith.constant 0 : index
    %c0_10 = arith.constant 0 : index
    %14 = vector.load %arg4[%c0_9, %c0_10] : memref<128x128xf32, #tpu.memory_space<vmem>>, vector<128x128xf32>
    %cst_11 = arith.constant dense<0.000000e+00> : vector<8x128xf32>
    %15 = tpu.matmul %10, %14, %cst_11 {dimension_numbers = #tpu.dot_dimension_numbers<[1], [0], [0], [1], [0, 0, 1, 1], [], []>} : vector<8x128xf32>, vector<128x128xf32>, vector<8x128xf32> -> vector<8x128xf32>
    %c0_12 = arith.constant 0 : index
    %c0_13 = arith.constant 0 : index
    %16 = vector.load %arg5[%c0_12, %c0_13] : memref<1x128xf32, #tpu.memory_space<vmem>>, vector<1x128xf32>
    %17 = vector.broadcast %16 : vector<1x128xf32> to vector<8x128xf32>
    %18 = arith.addf %15, %17 : vector<8x128xf32>
    %cst_14 = arith.constant 0.000000e+00 : f32
    %19 = vector.broadcast %cst_14 : f32 to vector<8x128xf32>
    %20 = arith.maximumf %18, %19 : vector<8x128xf32>
    %c0_15 = arith.constant 0 : index
    %c0_16 = arith.constant 0 : index
    %21 = vector.load %arg6[%c0_15, %c0_16] : memref<128x128xf32, #tpu.memory_space<vmem>>, vector<128x128xf32>
    %cst_17 = arith.constant dense<0.000000e+00> : vector<8x128xf32>
    %22 = tpu.matmul %13, %21, %cst_17 {dimension_numbers = #tpu.dot_dimension_numbers<[1], [0], [0], [1], [0, 0, 1, 1], [], []>} : vector<8x128xf32>, vector<128x128xf32>, vector<8x128xf32> -> vector<8x128xf32>
    %c0_18 = arith.constant 0 : index
    %c0_19 = arith.constant 0 : index
    %23 = vector.load %arg7[%c0_18, %c0_19] : memref<1x128xf32, #tpu.memory_space<vmem>>, vector<1x128xf32>
    %24 = vector.broadcast %23 : vector<1x128xf32> to vector<8x128xf32>
    %25 = arith.addf %22, %24 : vector<8x128xf32>
    %cst_20 = arith.constant 0.000000e+00 : f32
    %26 = vector.broadcast %cst_20 : f32 to vector<8x128xf32>
    %27 = arith.maximumf %25, %26 : vector<8x128xf32>
    %c0_21 = arith.constant 0 : index
    %c0_22 = arith.constant 0 : index
    %28 = vector.load %arg8[%c0_21, %c0_22] : memref<128x128xf32, #tpu.memory_space<vmem>>, vector<128x128xf32>
    %cst_23 = arith.constant dense<0.000000e+00> : vector<8x128xf32>
    %29 = tpu.matmul %20, %28, %cst_23 {dimension_numbers = #tpu.dot_dimension_numbers<[1], [0], [0], [1], [0, 0, 1, 1], [], []>} : vector<8x128xf32>, vector<128x128xf32>, vector<8x128xf32> -> vector<8x128xf32>
    %c0_24 = arith.constant 0 : index
    %c0_25 = arith.constant 0 : index
    %30 = vector.load %arg9[%c0_24, %c0_25] : memref<128x128xf32, #tpu.memory_space<vmem>>, vector<128x128xf32>
    %cst_26 = arith.constant dense<0.000000e+00> : vector<8x128xf32>
    %31 = tpu.matmul %27, %30, %cst_26 {dimension_numbers = #tpu.dot_dimension_numbers<[1], [0], [0], [1], [0, 0, 1, 1], [], []>} : vector<8x128xf32>, vector<128x128xf32>, vector<8x128xf32> -> vector<8x128xf32>
    %32 = arith.addf %29, %31 : vector<8x128xf32>
    %c0_27 = arith.constant 0 : index
    %c0_28 = arith.constant 0 : index
    %33 = vector.load %arg10[%c0_27, %c0_28] : memref<1x128xf32, #tpu.memory_space<vmem>>, vector<1x128xf32>
    %34 = vector.broadcast %33 : vector<1x128xf32> to vector<8x128xf32>
    %35 = arith.addf %32, %34 : vector<8x128xf32>
    %36 = arith.negf %35 : vector<8x128xf32>
    %37 = math.exp %36 : vector<8x128xf32>
    %cst_29 = arith.constant 1.000000e+00 : f32
    %38 = vector.broadcast %cst_29 : f32 to vector<8x128xf32>
    %39 = arith.addf %38, %37 : vector<8x128xf32>
    %40 = arith.divf %38, %39 : vector<8x128xf32>
    %c0_30 = arith.constant 0 : index
    %c128 = arith.constant 128 : index
    %41 = vector.load %arg11[%c0_30, %c128] : memref<8x256xf32, #tpu.memory_space<vmem>>, vector<8x128xf32>
    tpu.vector_store %arg11[%c0_30, %c128], %40 {strides = array<i32>} : memref<8x256xf32, #tpu.memory_space<vmem>>, vector<8x128xf32>,
    return
  }
  func.func @transform_0(%arg0: i32) -> (i32, i32) {
    %c0_i32 = arith.constant 0 : i32
    %c0_i32_0 = arith.constant 0 : i32
    return %arg0, %c0_i32 : i32, i32
  }
  func.func @transform_1(%arg0: i32) -> (i32, i32) {
    %c0_i32 = arith.constant 0 : i32
    %c0_i32_0 = arith.constant 0 : i32
    %c0_i32_1 = arith.constant 0 : i32
    return %c0_i32, %c0_i32_0 : i32, i32
  }
  func.func @transform_2(%arg0: i32) -> (i32, i32) {
    %c0_i32 = arith.constant 0 : i32
    %c0_i32_0 = arith.constant 0 : i32
    %c0_i32_1 = arith.constant 0 : i32
    return %c0_i32, %c0_i32_0 : i32, i32
  }
  func.func @transform_3(%arg0: i32) -> (i32, i32) {
    %c0_i32 = arith.constant 0 : i32
    %c0_i32_0 = arith.constant 0 : i32
    %c0_i32_1 = arith.constant 0 : i32
    return %c0_i32, %c0_i32_0 : i32, i32
  }
  func.func @transform_4(%arg0: i32) -> (i32, i32) {
    %c0_i32 = arith.constant 0 : i32
    %c0_i32_0 = arith.constant 0 : i32
    %c0_i32_1 = arith.constant 0 : i32
    return %c0_i32, %c0_i32_0 : i32, i32
  }
  func.func @transform_5(%arg0: i32) -> (i32, i32) {
    %c0_i32 = arith.constant 0 : i32
    %c0_i32_0 = arith.constant 0 : i32
    %c0_i32_1 = arith.constant 0 : i32
    return %c0_i32, %c0_i32_0 : i32, i32
  }
  func.func @transform_6(%arg0: i32) -> (i32, i32) {
    %c0_i32 = arith.constant 0 : i32
    %c0_i32_0 = arith.constant 0 : i32
    %c0_i32_1 = arith.constant 0 : i32
    return %c0_i32, %c0_i32_0 : i32, i32
  }
  func.func @transform_7(%arg0: i32) -> (i32, i32) {
    %c0_i32 = arith.constant 0 : i32
    %c0_i32_0 = arith.constant 0 : i32
    %c0_i32_1 = arith.constant 0 : i32
    return %c0_i32, %c0_i32_0 : i32, i32
  }
  func.func @transform_8(%arg0: i32) -> (i32, i32) {
    %c0_i32 = arith.constant 0 : i32
    %c0_i32_0 = arith.constant 0 : i32
    %c0_i32_1 = arith.constant 0 : i32
    return %c0_i32, %c0_i32_0 : i32, i32
  }
  func.func @transform_9(%arg0: i32) -> (i32, i32) {
    %c0_i32 = arith.constant 0 : i32
    %c0_i32_0 = arith.constant 0 : i32
    %c0_i32_1 = arith.constant 0 : i32
    return %c0_i32, %c0_i32_0 : i32, i32
  }
  func.func @transform_10(%arg0: i32) -> (i32, i32) {
    %c0_i32 = arith.constant 0 : i32
    %c0_i32_0 = arith.constant 0 : i32
    return %arg0, %c0_i32 : i32, i32
  }
}

module attributes {stable_mosaic.version = 11 : i64} {
  func.func @relation_header_kernel(%arg0: i32, %arg1: memref<8x32xf32, #tpu.memory_space<vmem>>, %arg2: memref<32x384xf32, #tpu.memory_space<vmem>>, %arg3: memref<1x384xf32, #tpu.memory_space<vmem>>, %arg4: memref<128x128xf32, #tpu.memory_space<vmem>>, %arg5: memref<1x128xf32, #tpu.memory_space<vmem>>, %arg6: memref<128x128xf32, #tpu.memory_space<vmem>>, %arg7: memref<1x128xf32, #tpu.memory_space<vmem>>, %arg8: memref<128x128xf32, #tpu.memory_space<vmem>>, %arg9: memref<128x128xf32, #tpu.memory_space<vmem>>, %arg10: memref<1x128xf32, #tpu.memory_space<vmem>>, %arg11: memref<8x256xf32, #tpu.memory_space<vmem>>) attributes {dimension_semantics = [#tpu.dimension_semantics<parallel>], iteration_bounds = array<i64: 2>, scalar_prefetch = 0 : i64, scratch_operands = 0 : i64, tpu.core_type = #tpu.core_type<tc>, window_params = [{transform_indices = @transform_0, window_bounds = array<i64: 8, 32>}, {pipeline_mode = #tpu.pipeline_mode<synchronous>, transform_indices = @transform_1, window_bounds = array<i64: 32, 384>}, {pipeline_mode = #tpu.pipeline_mode<synchronous>, transform_indices = @transform_2, window_bounds = array<i64: 1, 384>}, {pipeline_mode = #tpu.pipeline_mode<synchronous>, transform_indices = @transform_3, window_bounds = array<i64: 128, 128>}, {pipeline_mode = #tpu.pipeline_mode<synchronous>, transform_indices = @transform_4, window_bounds = array<i64: 1, 128>}, {pipeline_mode = #tpu.pipeline_mode<synchronous>, transform_indices = @transform_5, window_bounds = array<i64: 128, 128>}, {pipeline_mode = #tpu.pipeline_mode<synchronous>, transform_indices = @transform_6, window_bounds = array<i64: 1, 128>}, {pipeline_mode = #tpu.pipeline_mode<synchronous>, transform_indices = @transform_7, window_bounds = array<i64: 128, 128>}, {pipeline_mode = #tpu.pipeline_mode<synchronous>, transform_indices = @transform_8, window_bounds = array<i64: 128, 128>}, {pipeline_mode = #tpu.pipeline_mode<synchronous>, transform_indices = @transform_9, window_bounds = array<i64: 1, 128>}, {transform_indices = @transform_10, window_bounds = array<i64: 8, 256>}]} {
    %c0 = arith.constant 0 : index
    %c0_0 = arith.constant 0 : index
    %0 = vector.load %arg1[%c0, %c0_0] : memref<8x32xf32, #tpu.memory_space<vmem>>, vector<8x32xf32>
    %c0_1 = arith.constant 0 : index
    %c0_2 = arith.constant 0 : index
    %1 = vector.load %arg2[%c0_1, %c0_2] : memref<32x384xf32, #tpu.memory_space<vmem>>, vector<32x384xf32>
    %cst = arith.constant dense<0.000000e+00> : vector<8x384xf32>
    %2 = tpu.matmul %0, %1, %cst {dimension_numbers = #tpu.dot_dimension_numbers<[1], [0], [0], [1], [0, 0, 1, 1], [], []>} : vector<8x32xf32>, vector<32x384xf32>, vector<8x384xf32> -> vector<8x384xf32>
    %c0_3 = arith.constant 0 : index
    %c0_4 = arith.constant 0 : index
    %3 = vector.load %arg3[%c0_3, %c0_4] : memref<1x384xf32, #tpu.memory_space<vmem>>, vector<1x384xf32>
    %4 = vector.broadcast %3 : vector<1x384xf32> to vector<8x384xf32>
    %5 = arith.addf %2, %4 : vector<8x384xf32>
    %6 = vector.extract_strided_slice %5 {offsets = [0, 256], sizes = [8, 128], strides = [1, 1]} : vector<8x384xf32> to vector<8x128xf32>
    %c0_5 = arith.constant 0 : index
    %c0_6 = arith.constant 0 : index
    %7 = vector.load %arg11[%c0_5, %c0_6] : memref<8x256xf32, #tpu.memory_space<vmem>>, vector<8x128xf32>
    tpu.vector_store %arg11[%c0_5, %c0_6], %6 {strides = array<i32>} : memref<8x256xf32, #tpu.memory_space<vmem>>, vector<8x128xf32>,
    %8 = vector.extract_strided_slice %5 {offsets = [0, 0], sizes = [8, 128], strides = [1, 1]} : vector<8x384xf32> to vector<8x128xf32>
    %cst_7 = arith.constant 0.000000e+00 : f32
    %9 = vector.broadcast %cst_7 : f32 to vector<8x128xf32>
    %10 = arith.maximumf %8, %9 : vector<8x128xf32>
    %11 = vector.extract_strided_slice %5 {offsets = [0, 128], sizes = [8, 128], strides = [1, 1]} : vector<8x384xf32> to vector<8x128xf32>
    %cst_8 = arith.constant 0.000000e+00 : f32
    %12 = vector.broadcast %cst_8 : f32 to vector<8x128xf32>
    %13 = arith.maximumf %11, %12 : vector<8x128xf32>
    %c0_9 = arith.constant 0 : index
    %c0_10 = arith.constant 0 : index
    %14 = vector.load %arg4[%c0_9, %c0_10] : memref<128x128xf32, #tpu.memory_space<vmem>>, vector<128x128xf32>
    %cst_11 = arith.constant dense<0.000000e+00> : vector<8x128xf32>
    %15 = tpu.matmul %10, %14, %cst_11 {dimension_numbers = #tpu.dot_dimension_numbers<[1], [0], [0], [1], [0, 0, 1, 1], [], []>} : vector<8x128xf32>, vector<128x128xf32>, vector<8x128xf32> -> vector<8x128xf32>
    %c0_12 = arith.constant 0 : index
    %c0_13 = arith.constant 0 : index
    %16 = vector.load %arg5[%c0_12, %c0_13] : memref<1x128xf32, #tpu.memory_space<vmem>>, vector<1x128xf32>
    %17 = vector.broadcast %16 : vector<1x128xf32> to vector<8x128xf32>
    %18 = arith.addf %15, %17 : vector<8x128xf32>
    %cst_14 = arith.constant 0.000000e+00 : f32
    %19 = vector.broadcast %cst_14 : f32 to vector<8x128xf32>
    %20 = arith.maximumf %18, %19 : vector<8x128xf32>
    %c0_15 = arith.constant 0 : index
    %c0_16 = arith.constant 0 : index
    %21 = vector.load %arg6[%c0_15, %c0_16] : memref<128x128xf32, #tpu.memory_space<vmem>>, vector<128x128xf32>
    %cst_17 = arith.constant dense<0.000000e+00> : vector<8x128xf32>
    %22 = tpu.matmul %13, %21, %cst_17 {dimension_numbers = #tpu.dot_dimension_numbers<[1], [0], [0], [1], [0, 0, 1, 1], [], []>} : vector<8x128xf32>, vector<128x128xf32>, vector<8x128xf32> -> vector<8x128xf32>
    %c0_18 = arith.constant 0 : index
    %c0_19 = arith.constant 0 : index
    %23 = vector.load %arg7[%c0_18, %c0_19] : memref<1x128xf32, #tpu.memory_space<vmem>>, vector<1x128xf32>
    %24 = vector.broadcast %23 : vector<1x128xf32> to vector<8x128xf32>
    %25 = arith.addf %22, %24 : vector<8x128xf32>
    %cst_20 = arith.constant 0.000000e+00 : f32
    %26 = vector.broadcast %cst_20 : f32 to vector<8x128xf32>
    %27 = arith.maximumf %25, %26 : vector<8x128xf32>
    %c0_21 = arith.constant 0 : index
    %c0_22 = arith.constant 0 : index
    %28 = vector.load %arg8[%c0_21, %c0_22] : memref<128x128xf32, #tpu.memory_space<vmem>>, vector<128x128xf32>
    %cst_23 = arith.constant dense<0.000000e+00> : vector<8x128xf32>
    %29 = tpu.matmul %20, %28, %cst_23 {dimension_numbers = #tpu.dot_dimension_numbers<[1], [0], [0], [1], [0, 0, 1, 1], [], []>} : vector<8x128xf32>, vector<128x128xf32>, vector<8x128xf32> -> vector<8x128xf32>
    %c0_24 = arith.constant 0 : index
    %c0_25 = arith.constant 0 : index
    %30 = vector.load %arg9[%c0_24, %c0_25] : memref<128x128xf32, #tpu.memory_space<vmem>>, vector<128x128xf32>
    %cst_26 = arith.constant dense<0.000000e+00> : vector<8x128xf32>
    %31 = tpu.matmul %27, %30, %cst_26 {dimension_numbers = #tpu.dot_dimension_numbers<[1], [0], [0], [1], [0, 0, 1, 1], [], []>} : vector<8x128xf32>, vector<128x128xf32>, vector<8x128xf32> -> vector<8x128xf32>
    %32 = arith.addf %29, %31 : vector<8x128xf32>
    %c0_27 = arith.constant 0 : index
    %c0_28 = arith.constant 0 : index
    %33 = vector.load %arg10[%c0_27, %c0_28] : memref<1x128xf32, #tpu.memory_space<vmem>>, vector<1x128xf32>
    %34 = vector.broadcast %33 : vector<1x128xf32> to vector<8x128xf32>
    %35 = arith.addf %32, %34 : vector<8x128xf32>
    %36 = arith.negf %35 : vector<8x128xf32>
    %37 = math.exp %36 : vector<8x128xf32>
    %cst_29 = arith.constant 1.000000e+00 : f32
    %38 = vector.broadcast %cst_29 : f32 to vector<8x128xf32>
    %39 = arith.addf %38, %37 : vector<8x128xf32>
    %40 = arith.divf %38, %39 : vector<8x128xf32>
    %c0_30 = arith.constant 0 : index
    %c128 = arith.constant 128 : index
    %41 = vector.load %arg11[%c0_30, %c128] : memref<8x256xf32, #tpu.memory_space<vmem>>, vector<8x128xf32>
    tpu.vector_store %arg11[%c0_30, %c128], %40 {strides = array<i32>} : memref<8x256xf32, #tpu.memory_space<vmem>>, vector<8x128xf32>,
    return
  }
  func.func @transform_0(%arg0: i32) -> (i32, i32) {
    %c0_i32 = arith.constant 0 : i32
    %c0_i32_0 = arith.constant 0 : i32
    return %arg0, %c0_i32 : i32, i32
  }
  func.func @transform_1(%arg0: i32) -> (i32, i32) {
    %c0_i32 = arith.constant 0 : i32
    %c0_i32_0 = arith.constant 0 : i32
    %c0_i32_1 = arith.constant 0 : i32
    return %c0_i32, %c0_i32_0 : i32, i32
  }
  func.func @transform_2(%arg0: i32) -> (i32, i32) {
    %c0_i32 = arith.constant 0 : i32
    %c0_i32_0 = arith.constant 0 : i32
    %c0_i32_1 = arith.constant 0 : i32
    return %c0_i32, %c0_i32_0 : i32, i32
  }
  func.func @transform_3(%arg0: i32) -> (i32, i32) {
    %c0_i32 = arith.constant 0 : i32
    %c0_i32_0 = arith.constant 0 : i32
    %c0_i32_1 = arith.constant 0 : i32
    return %c0_i32, %c0_i32_0 : i32, i32
  }
  func.func @transform_4(%arg0: i32) -> (i32, i32) {
    %c0_i32 = arith.constant 0 : i32
    %c0_i32_0 = arith.constant 0 : i32
    %c0_i32_1 = arith.constant 0 : i32
    return %c0_i32, %c0_i32_0 : i32, i32
  }
  func.func @transform_5(%arg0: i32) -> (i32, i32) {
    %c0_i32 = arith.constant 0 : i32
    %c0_i32_0 = arith.constant 0 : i32
    %c0_i32_1 = arith.constant 0 : i32
    return %c0_i32, %c0_i32_0 : i32, i32
  }
  func.func @transform_6(%arg0: i32) -> (i32, i32) {
    %c0_i32 = arith.constant 0 : i32
    %c0_i32_0 = arith.constant 0 : i32
    %c0_i32_1 = arith.constant 0 : i32
    return %c0_i32, %c0_i32_0 : i32, i32
  }
  func.func @transform_7(%arg0: i32) -> (i32, i32) {
    %c0_i32 = arith.constant 0 : i32
    %c0_i32_0 = arith.constant 0 : i32
    %c0_i32_1 = arith.constant 0 : i32
    return %c0_i32, %c0_i32_0 : i32, i32
  }
  func.func @transform_8(%arg0: i32) -> (i32, i32) {
    %c0_i32 = arith.constant 0 : i32
    %c0_i32_0 = arith.constant 0 : i32
    %c0_i32_1 = arith.constant 0 : i32
    return %c0_i32, %c0_i32_0 : i32, i32
  }
  func.func @transform_9(%arg0: i32) -> (i32, i32) {
    %c0_i32 = arith.constant 0 : i32
    %c0_i32_0 = arith.constant 0 : i32
    %c0_i32_1 = arith.constant 0 : i32
    return %c0_i32, %c0_i32_0 : i32, i32
  }
  func.func @transform_10(%arg0: i32) -> (i32, i32) {
    %c0_i32 = arith.constant 0 : i32
    %c0_i32_0 = arith.constant 0 : i32
    return %arg0, %c0_i32 : i32, i32
  }
}

</mosaic_0001>

<llo_original>
// kernel: tpu_custom_call.1
$region0: #{tpu_custom_call.1}
  #allocation0 [shape = 'u32[]', space=smem, size = 0x4, offset = 0x4, fixed_abs, tag = 'smem constant byte address 0x4 - core index']
  #allocation1 [shape = 'u32[72,128]{1,0:T(1,128)}', space=vmem, size = 0x9000, scoped, tag = 'internal scratch']
  %s0 = inlined_call_operand.hbm [shape: f32[16,32], index: 0, kind: input, shape index: {}]
  %s1 = inlined_call_operand.hbm [shape: f32[32,384], index: 1, kind: input, shape index: {}]
  %s2 = inlined_call_operand.hbm [shape: f32[1,384], index: 2, kind: input, shape index: {}]
  %s3 = inlined_call_operand.hbm [shape: f32[128,128], index: 3, kind: input, shape index: {}]
  %s4 = inlined_call_operand.vmem [shape: f32[1,128], index: 4, kind: input, shape index: {}]
  %s5 = inlined_call_operand.hbm [shape: f32[128,128], index: 5, kind: input, shape index: {}]
  %s6 = inlined_call_operand.vmem [shape: f32[1,128], index: 6, kind: input, shape index: {}]
  %s7 = inlined_call_operand.hbm [shape: f32[128,128], index: 7, kind: input, shape index: {}]
  %s8 = inlined_call_operand.hbm [shape: f32[128,128], index: 8, kind: input, shape index: {}]
  %s9 = inlined_call_operand.vmem [shape: f32[1,128], index: 9, kind: input, shape index: {}]
  %s10 = inlined_call_operand.hbm [shape: f32[16,256], index: 10, kind: output, shape index: {}]
  %s11 = sld [smem:[#allocation0]]
  $region101: #{tpu_custom_call.1} parent=0
    _
  %s13 = ssub.s32 1, %s11
  %s14 = scalar_select 0, %s13, %s11
  $region1: #{tpu_custom_call.1} parent=0
    #allocation2 [shape = 'u8[8192]{0}', space=vmem, size = 0x2000, scoped, tag = 'input window, operand 0']
    #allocation3 [shape = 's32[2]{0}', space=sflag, size = 0x8, scoped, tag = 'scoped memory for tpu_custom_call.1']
    #allocation4 [shape = 's32[2]{0}', space=sflag, size = 0x8, scoped, tag = 'scoped memory for tpu_custom_call.1']
    #allocation5 [shape = 'u8[49152]{0}', space=vmem, size = 0xc000, scoped, tag = 'input window, operand 1, single buffered']
    #allocation6 [shape = 's32[1]{0}', space=sflag, size = 0x4, scoped, tag = 'scoped memory for tpu_custom_call.1']
    #allocation7 [shape = 'u8[1536]{0}', space=vmem, size = 0x800, scoped, tag = 'input window, operand 2, single buffered']
    #allocation8 [shape = 'u8[65536]{0}', space=vmem, size = 0x10000, scoped, tag = 'input window, operand 3, single buffered']
    #allocation9 [shape = 's32[1]{0}', space=sflag, size = 0x4, scoped, tag = 'scoped memory for tpu_custom_call.1']
    #allocation10 [shape = 'u8[65536]{0}', space=vmem, size = 0x10000, scoped, tag = 'input window, operand 5, single buffered']
    #allocation11 [shape = 'u8[65536]{0}', space=vmem, size = 0x10000, scoped, tag = 'input window, operand 7, single buffered']
    #allocation12 [shape = 's32[1]{0}', space=sflag, size = 0x4, scoped, tag = 'scoped memory for tpu_custom_call.1']
    #allocation13 [shape = 'u8[65536]{0}', space=vmem, size = 0x10000, scoped, tag = 'input window, operand 8, single buffered']
    #allocation14 [shape = 'u8[16384]{0}', space=vmem, size = 0x4000, scoped, tag = 'output window, operand 0']
    %15 = vsyncpa [#allocation3], 0
    %s16 = scalar_lea.sflag [#allocation3], 1
    %17 = vsyncpa %s16, 0
    %18 = vsyncpa [#allocation6], 0
    %19 = vsyncpa [#allocation9], 0
    %20 = vsyncpa [#allocation12], 0
    %21 = vsyncpa [#allocation4], 0
    %s22 = scalar_lea.sflag [#allocation4], 1
    %23 = vsyncpa %s22, 0
    loop: start=0, step=1, limit=4
    $region2: #{tpu_custom_call.1} parent=1 // loop_pre_header
      _
    $region3: #{tpu_custom_call.1} parent=1 // loop_header
      %s25 = sphi 0, %s29
      %p26 = scmp.ge.s32.totalorder %s25, 4
      %s35 = sphi 0, %s37
      %s38 = sphi 0, %s35
      %s39 = sphi 0, %s38
      %s55 = sphi 0, %s39
      %s59 = sphi 0, %s59
      %s61 = sphi 0, %s59
      %s62 = sphi 0, %s61
      %s76 = sphi 0, %s62
      %s80 = sphi 0, %s80
      %s82 = sphi 0, %s80
      %s83 = sphi 0, %s82
      %s97 = sphi 0, %s83
      %s101 = sphi 0, %s101
      %s103 = sphi 0, %s101
      %s104 = sphi 0, %s103
      %s118 = sphi 0, %s104
      %s122 = sphi 0, %s122
      %s124 = sphi 0, %s122
      %s125 = sphi 0, %s124
      %s139 = sphi 0, %s125
      %s143 = sphi 0, %s143
      %s145 = sphi 0, %s143
      %s146 = sphi 0, %s145
      %s160 = sphi 0, %s146
      %s164 = sphi 0, %s164
      %s166 = sphi 0, %s164
      %s167 = sphi 0, %s166
      %s181 = sphi 0, %s167
      %s185 = sphi 0, %s185
      %s187 = sphi 0, %s185
      %s188 = sphi 0, %s187
      %s202 = sphi 0, %s188
      %s206 = sphi 0, %s206
      %s208 = sphi 0, %s206
      %s209 = sphi 0, %s208
      %s223 = sphi 0, %s209
      %s227 = sphi 0, %s227
      %s229 = sphi 0, %s227
      %s230 = sphi 0, %s229
      %s244 = sphi 0, %s230
      %s250 = sphi 0, %s252
      %s253 = sphi 0, %s250
      %s254 = sphi 0, %s253
      %s270 = sphi 0, %s254
    $region4: #{tpu_custom_call.1} parent=1 // loop_header_branch
      %28 = sbr.rel (%p26) target = $region8
    $region5: #{tpu_custom_call.1} parent=1 // loop_body
      %s30 = ssub.s32 %s25, 1
      %s31 = ssub.s32 %s25, 2
      %s32 = sadd.s32 %s25, 1
      %s33 = ssub.s32 %s25, %s32
      %p34 = scmp.eq.s32.totalorder %s33, 0
      %s36 = sadd.s32 %s35, 1
      %s37 = scalar_select %p34, %s35, %s36
      %p40 = pneg %p34
      %p41 = scmp.eq.s32.totalorder %s25, 1
      %p42 = por %p40, %p41
      %p43 = scmp.ne.s32.totalorder %s35, %s38
      %p44 = scmp.eq.s32.totalorder %s25, 0
      %p45 = por %p43, %p44
      %p46 = scmp.ne.s32.totalorder %s35, %s38
      %p47 = scmp.eq.s32.totalorder %s30, 1
      %p48 = por %p46, %p47
      %p49 = scmp.ne.s32.totalorder %s38, %s39
      %p50 = scmp.eq.s32.totalorder %s30, 0
      %p51 = por %p49, %p50
      %p52 = scmp.ne.s32.totalorder %s38, %s39
      %p53 = scmp.eq.s32.totalorder %s31, 1
      %p54 = por %p52, %p53
      %p56 = scmp.ne.s32.totalorder %s39, %s55
      %p57 = scmp.eq.s32.totalorder %s31, 0
      %p58 = por %p56, %p57
      %s60 = sadd.s32 %s59, 1
      %p63 = scmp.eq.s32.totalorder %s25, 1
      %p64 = scmp.ne.s32.totalorder %s59, %s61
      %p65 = scmp.eq.s32.totalorder %s25, 0
      %p66 = por %p64, %p65
      %p67 = scmp.ne.s32.totalorder %s59, %s61
      %p68 = scmp.eq.s32.totalorder %s30, 1
      %p69 = por %p67, %p68
      %p70 = scmp.ne.s32.totalorder %s61, %s62
      %p71 = scmp.eq.s32.totalorder %s30, 0
      %p72 = por %p70, %p71
      %p73 = scmp.ne.s32.totalorder %s61, %s62
      %p74 = scmp.eq.s32.totalorder %s31, 1
      %p75 = por %p73, %p74
      %p77 = scmp.ne.s32.totalorder %s62, %s76
      %p78 = scmp.eq.s32.totalorder %s31, 0
      %p79 = por %p77, %p78
      %s81 = sadd.s32 %s80, 1
      %p84 = scmp.eq.s32.totalorder %s25, 1
      %p85 = scmp.ne.s32.totalorder %s80, %s82
      %p86 = scmp.eq.s32.totalorder %s25, 0
      %p87 = por %p85, %p86
      %p88 = scmp.ne.s32.totalorder %s80, %s82
      %p89 = scmp.eq.s32.totalorder %s30, 1
      %p90 = por %p88, %p89
      %p91 = scmp.ne.s32.totalorder %s82, %s83
      %p92 = scmp.eq.s32.totalorder %s30, 0
      %p93 = por %p91, %p92
      %p94 = scmp.ne.s32.totalorder %s82, %s83
      %p95 = scmp.eq.s32.totalorder %s31, 1
      %p96 = por %p94, %p95
      %p98 = scmp.ne.s32.totalorder %s83, %s97
      %p99 = scmp.eq.s32.totalorder %s31, 0
      %p100 = por %p98, %p99
      %s102 = sadd.s32 %s101, 1
      %p105 = scmp.eq.s32.totalorder %s25, 1
      %p106 = scmp.ne.s32.totalorder %s101, %s103
      %p107 = scmp.eq.s32.totalorder %s25, 0
      %p108 = por %p106, %p107
      %p109 = scmp.ne.s32.totalorder %s101, %s103
      %p110 = scmp.eq.s32.totalorder %s30, 1
      %p111 = por %p109, %p110
      %p112 = scmp.ne.s32.totalorder %s103, %s104
      %p113 = scmp.eq.s32.totalorder %s30, 0
      %p114 = por %p112, %p113
      %p115 = scmp.ne.s32.totalorder %s103, %s104
      %p116 = scmp.eq.s32.totalorder %s31, 1
      %p117 = por %p115, %p116
      %p119 = scmp.ne.s32.totalorder %s104, %s118
      %p120 = scmp.eq.s32.totalorder %s31, 0
      %p121 = por %p119, %p120
      %s123 = sadd.s32 %s122, 1
      %p126 = scmp.eq.s32.totalorder %s25, 1
      %p127 = scmp.ne.s32.totalorder %s122, %s124
      %p128 = scmp.eq.s32.totalorder %s25, 0
      %p129 = por %p127, %p128
      %p130 = scmp.ne.s32.totalorder %s122, %s124
      %p131 = scmp.eq.s32.totalorder %s30, 1
      %p132 = por %p130, %p131
      %p133 = scmp.ne.s32.totalorder %s124, %s125
      %p134 = scmp.eq.s32.totalorder %s30, 0
      %p135 = por %p133, %p134
      %p136 = scmp.ne.s32.totalorder %s124, %s125
      %p137 = scmp.eq.s32.totalorder %s31, 1
      %p138 = por %p136, %p137
      %p140 = scmp.ne.s32.totalorder %s125, %s139
      %p141 = scmp.eq.s32.totalorder %s31, 0
      %p142 = por %p140, %p141
      %s144 = sadd.s32 %s143, 1
      %p147 = scmp.eq.s32.totalorder %s25, 1
      %p148 = scmp.ne.s32.totalorder %s143, %s145
      %p149 = scmp.eq.s32.totalorder %s25, 0
      %p150 = por %p148, %p149
      %p151 = scmp.ne.s32.totalorder %s143, %s145
      %p152 = scmp.eq.s32.totalorder %s30, 1
      %p153 = por %p151, %p152
      %p154 = scmp.ne.s32.totalorder %s145, %s146
      %p155 = scmp.eq.s32.totalorder %s30, 0
      %p156 = por %p154, %p155
      %p157 = scmp.ne.s32.totalorder %s145, %s146
      %p158 = scmp.eq.s32.totalorder %s31, 1
      %p159 = por %p157, %p158
      %p161 = scmp.ne.s32.totalorder %s146, %s160
      %p162 = scmp.eq.s32.totalorder %s31, 0
      %p163 = por %p161, %p162
      %s165 = sadd.s32 %s164, 1
      %p168 = scmp.eq.s32.totalorder %s25, 1
      %p169 = scmp.ne.s32.totalorder %s164, %s166
      %p170 = scmp.eq.s32.totalorder %s25, 0
      %p171 = por %p169, %p170
      %p172 = scmp.ne.s32.totalorder %s164, %s166
      %p173 = scmp.eq.s32.totalorder %s30, 1
      %p174 = por %p172, %p173
      %p175 = scmp.ne.s32.totalorder %s166, %s167
      %p176 = scmp.eq.s32.totalorder %s30, 0
      %p177 = por %p175, %p176
      %p178 = scmp.ne.s32.totalorder %s166, %s167
      %p179 = scmp.eq.s32.totalorder %s31, 1
      %p180 = por %p178, %p179
      %p182 = scmp.ne.s32.totalorder %s167, %s181
      %p183 = scmp.eq.s32.totalorder %s31, 0
      %p184 = por %p182, %p183
      %s186 = sadd.s32 %s185, 1
      %p189 = scmp.eq.s32.totalorder %s25, 1
      %p190 = scmp.ne.s32.totalorder %s185, %s187
      %p191 = scmp.eq.s32.totalorder %s25, 0
      %p192 = por %p190, %p191
      %p193 = scmp.ne.s32.totalorder %s185, %s187
      %p194 = scmp.eq.s32.totalorder %s30, 1
      %p195 = por %p193, %p194
      %p196 = scmp.ne.s32.totalorder %s187, %s188
      %p197 = scmp.eq.s32.totalorder %s30, 0
      %p198 = por %p196, %p197
      %p199 = scmp.ne.s32.totalorder %s187, %s188
      %p200 = scmp.eq.s32.totalorder %s31, 1
      %p201 = por %p199, %p200
      %p203 = scmp.ne.s32.totalorder %s188, %s202
      %p204 = scmp.eq.s32.totalorder %s31, 0
      %p205 = por %p203, %p204
      %s207 = sadd.s32 %s206, 1
      %p210 = scmp.eq.s32.totalorder %s25, 1
      %p211 = scmp.ne.s32.totalorder %s206, %s208
      %p212 = scmp.eq.s32.totalorder %s25, 0
      %p213 = por %p211, %p212
      %p214 = scmp.ne.s32.totalorder %s206, %s208
      %p215 = scmp.eq.s32.totalorder %s30, 1
      %p216 = por %p214, %p215
      %p217 = scmp.ne.s32.totalorder %s208, %s209
      %p218 = scmp.eq.s32.totalorder %s30, 0
      %p219 = por %p217, %p218
      %p220 = scmp.ne.s32.totalorder %s208, %s209
      %p221 = scmp.eq.s32.totalorder %s31, 1
      %p222 = por %p220, %p221
      %p224 = scmp.ne.s32.totalorder %s209, %s223
      %p225 = scmp.eq.s32.totalorder %s31, 0
      %p226 = por %p224, %p225
      %s228 = sadd.s32 %s227, 1
      %p231 = scmp.eq.s32.totalorder %s25, 1
      %p232 = scmp.ne.s32.totalorder %s227, %s229
      %p233 = scmp.eq.s32.totalorder %s25, 0
      %p234 = por %p232, %p233
      %p235 = scmp.ne.s32.totalorder %s227, %s229
      %p236 = scmp.eq.s32.totalorder %s30, 1
      %p237 = por %p235, %p236
      %p238 = scmp.ne.s32.totalorder %s229, %s230
      %p239 = scmp.eq.s32.totalorder %s30, 0
      %p240 = por %p238, %p239
      %p241 = scmp.ne.s32.totalorder %s229, %s230
      %p242 = scmp.eq.s32.totalorder %s31, 1
      %p243 = por %p241, %p242
      %p245 = scmp.ne.s32.totalorder %s230, %s244
      %p246 = scmp.eq.s32.totalorder %s31, 0
      %p247 = por %p245, %p246
      %s248 = ssub.s32 %s25, %s32
      %p249 = scmp.eq.s32.totalorder %s248, 0
      %s251 = sadd.s32 %s250, 1
      %s252 = scalar_select %p249, %s250, %s251
      %p255 = pneg %p249
      %p256 = scmp.eq.s32.totalorder %s25, 1
      %p257 = por %p255, %p256
      %p258 = scmp.ne.s32.totalorder %s250, %s253
      %p259 = scmp.eq.s32.totalorder %s25, 0
      %p260 = por %p258, %p259
      %p261 = scmp.ne.s32.totalorder %s250, %s253
      %p262 = scmp.eq.s32.totalorder %s30, 1
      %p263 = por %p261, %p262
      %p264 = scmp.ne.s32.totalorder %s253, %s254
      %p265 = scmp.eq.s32.totalorder %s30, 0
      %p266 = por %p264, %p265
      %p267 = scmp.ne.s32.totalorder %s253, %s254
      %p268 = scmp.eq.s32.totalorder %s31, 1
      %p269 = por %p267, %p268
      %p271 = scmp.ne.s32.totalorder %s254, %s270
      %p272 = scmp.eq.s32.totalorder %s31, 0
      %p273 = por %p271, %p272
      %p274 = scmp.le.s32.totalorder 1, %s25
      %p275 = scmp.lt.s32.totalorder %s25, 3
      %p276 = pnand %p274, %p275
      %p277 = pneg %p276
      // Predicated region
      $region9: #{tpu_custom_call.1} parent=5 // pred_check
        _
      $region10: #{tpu_custom_call.1} parent=5 // pred_check_branch
        %279 = sbr.rel (%p276) target = $region12
      $region11: #{tpu_custom_call.1} parent=5 // pred_region
        %s280 = ssub.s32 %s25, 1
        // Predicated region
        $region13: #{tpu_custom_call.1} parent=11 // pred_check
          %p281 = pneg %p72
        $region14: #{tpu_custom_call.1} parent=11 // pred_check_branch
          %283 = sbr.rel (%p281) target = $region16
        $region15: #{tpu_custom_call.1} parent=11 // pred_region
          %285 = vsyncadd [#allocation6], 0
          %s286 = sshll.u32 %s1, 4
          %s287 = int_to_ptr.hbm [resolvable:$true] %s286
          %s288 = sshll.u32 [#allocation5], 4
          %s289 = int_to_ptr.vmem [resolvable:$true] %s288
          %294 = dma.hbm_to_vmem [thread:$0]  %s287, 1536, %s289, [#allocation6], 384, 384, 24
        $region16: #{tpu_custom_call.1} parent=11 // pred_fallthru
          _
        // Predicated region
        $region17: #{tpu_custom_call.1} parent=11 // pred_check
          %p295 = pneg %p93
        $region18: #{tpu_custom_call.1} parent=11 // pred_check_branch
          %297 = sbr.rel (%p295) target = $region20
        $region19: #{tpu_custom_call.1} parent=11 // pred_region
          %299 = vsyncadd [#allocation6], 0
          %s301 = sshll.u32 %s2, 4
          %s302 = int_to_ptr.hbm [resolvable:$true] %s301
          %s303 = sshll.u32 [#allocation7], 4
          %s304 = int_to_ptr.vmem [resolvable:$true] %s303
          %306 = dma.hbm_to_vmem [thread:$0]  %s302, 48, %s304, [#allocation6]
        $region20: #{tpu_custom_call.1} parent=11 // pred_fallthru
          _
        // Predicated region
        $region21: #{tpu_custom_call.1} parent=11 // pred_check
          %p307 = pneg %p114
        $region22: #{tpu_custom_call.1} parent=11 // pred_check_branch
          %309 = sbr.rel (%p307) target = $region24
        $region23: #{tpu_custom_call.1} parent=11 // pred_region
          %311 = vsyncadd [#allocation9], 0
          %s312 = sshll.u32 %s3, 4
          %s313 = int_to_ptr.hbm [resolvable:$true] %s312
          %s314 = sshll.u32 [#allocation8], 4
          %s315 = int_to_ptr.vmem [resolvable:$true] %s314
          %320 = dma.hbm_to_vmem [thread:$0]  %s313, 2048, %s315, [#allocation9], 128, 128, 8
        $region24: #{tpu_custom_call.1} parent=11 // pred_fallthru
          _
        // Predicated region
        $region25: #{tpu_custom_call.1} parent=11 // pred_check
          %p321 = pneg %p135
        $region26: #{tpu_custom_call.1} parent=11 // pred_check_branch
          %323 = sbr.rel (%p321) target = $region28
        $region27: #{tpu_custom_call.1} parent=11 // pred_region
          _
        $region28: #{tpu_custom_call.1} parent=11 // pred_fallthru
          _
        // Predicated region
        $region29: #{tpu_custom_call.1} parent=11 // pred_check
          %p324 = pneg %p156
        $region30: #{tpu_custom_call.1} parent=11 // pred_check_branch
          %326 = sbr.rel (%p324) target = $region32
        $region31: #{tpu_custom_call.1} parent=11 // pred_region
          %328 = vsyncadd [#allocation9], 0
          %s329 = sshll.u32 %s5, 4
          %s330 = int_to_ptr.hbm [resolvable:$true] %s329
          %s331 = sshll.u32 [#allocation10], 4
          %s332 = int_to_ptr.vmem [resolvable:$true] %s331
          %337 = dma.hbm_to_vmem [thread:$0]  %s330, 2048, %s332, [#allocation9], 128, 128, 8
        $region32: #{tpu_custom_call.1} parent=11 // pred_fallthru
          _
        // Predicated region
        $region33: #{tpu_custom_call.1} parent=11 // pred_check
          %p338 = pneg %p177
        $region34: #{tpu_custom_call.1} parent=11 // pred_check_branch
          %340 = sbr.rel (%p338) target = $region36
        $region35: #{tpu_custom_call.1} parent=11 // pred_region
          _
        $region36: #{tpu_custom_call.1} parent=11 // pred_fallthru
          _
        // Predicated region
        $region37: #{tpu_custom_call.1} parent=11 // pred_check
          %p341 = pneg %p198
        $region38: #{tpu_custom_call.1} parent=11 // pred_check_branch
          %343 = sbr.rel (%p341) target = $region40
        $region39: #{tpu_custom_call.1} parent=11 // pred_region
          %345 = vsyncadd [#allocation12], 0
          %s346 = sshll.u32 %s7, 4
          %s347 = int_to_ptr.hbm [resolvable:$true] %s346
          %s348 = sshll.u32 [#allocation11], 4
          %s349 = int_to_ptr.vmem [resolvable:$true] %s348
          %354 = dma.hbm_to_vmem [thread:$0]  %s347, 2048, %s349, [#allocation12], 128, 128, 8
        $region40: #{tpu_custom_call.1} parent=11 // pred_fallthru
          _
        // Predicated region
        $region41: #{tpu_custom_call.1} parent=11 // pred_check
          %p355 = pneg %p219
        $region42: #{tpu_custom_call.1} parent=11 // pred_check_branch
          %357 = sbr.rel (%p355) target = $region44
        $region43: #{tpu_custom_call.1} parent=11 // pred_region
          %359 = vsyncadd [#allocation12], 0
          %s360 = sshll.u32 %s8, 4
          %s361 = int_to_ptr.hbm [resolvable:$true] %s360
          %s362 = sshll.u32 [#allocation13], 4
          %s363 = int_to_ptr.vmem [resolvable:$true] %s362
          %368 = dma.hbm_to_vmem [thread:$0]  %s361, 2048, %s363, [#allocation12], 128, 128, 8
        $region44: #{tpu_custom_call.1} parent=11 // pred_fallthru
          _
        // Predicated region
        $region45: #{tpu_custom_call.1} parent=11 // pred_check
          %p369 = pneg %p240
        $region46: #{tpu_custom_call.1} parent=11 // pred_check_branch
          %371 = sbr.rel (%p369) target = $region48
        $region47: #{tpu_custom_call.1} parent=11 // pred_region
          _
        $region48: #{tpu_custom_call.1} parent=11 // pred_fallthru
          _
      $region12: #{tpu_custom_call.1} parent=5 // pred_fallthru
        _
      %p372 = scmp.lt.s32.totalorder %s25, 2
      // Predicated region
      $region49: #{tpu_custom_call.1} parent=5 // pred_check
        %p373 = pneg %p372
      $region50: #{tpu_custom_call.1} parent=5 // pred_check_branch
        %375 = sbr.rel (%p373) target = $region52
      $region51: #{tpu_custom_call.1} parent=5 // pred_region
        // Predicated region
        $region53: #{tpu_custom_call.1} parent=51 // pred_check
          %p376 = pneg %p45
        $region54: #{tpu_custom_call.1} parent=51 // pred_check_branch
          %378 = sbr.rel (%p376) target = $region56
        $region55: #{tpu_custom_call.1} parent=51 // pred_region
          %s379 = sand.u32 %s35, 1
          %s380 = scalar_lea.sflag [#allocation3], %s379
          %s381 = sand.u32 %s35, 1
          %s382 = smul.addr %s381, 8
          %s383 = scalar_lea.vmem [#allocation2], %s382
          %385 = vsyncadd %s380, 0
          %s386 = smul.addr %s25, 8
          %s387 = scalar_lea.hbm %s0, %s386
          %s389 = sshll.u32 %s387, 4
          %s390 = int_to_ptr.hbm [resolvable:$true] %s389
          %s391 = sshll.u32 %s383, 4
          %s392 = int_to_ptr.vmem [resolvable:$true] %s391
          %394 = dma.hbm_to_vmem [thread:$0]  %s390, 128, %s392, %s380
        $region56: #{tpu_custom_call.1} parent=51 // pred_fallthru
          _
      $region52: #{tpu_custom_call.1} parent=5 // pred_fallthru
        _
      %p395 = scmp.le.s32.totalorder 1, %s25
      %p396 = scmp.lt.s32.totalorder %s25, 3
      %p397 = pnand %p395, %p396
      %p398 = pneg %p397
      // Predicated region
      $region57: #{tpu_custom_call.1} parent=5 // pred_check
        _
      $region58: #{tpu_custom_call.1} parent=5 // pred_check_branch
        %400 = sbr.rel (%p397) target = $region60
      $region59: #{tpu_custom_call.1} parent=5 // pred_region
        %s401 = ssub.s32 %s25, 1
        %s402 = sand.u32 %s38, 1
        %s403 = scalar_lea.sflag [#allocation3], %s402
        %s404 = sand.u32 %s38, 1
        %s405 = smul.addr %s404, 8
        %s406 = scalar_lea.vmem [#allocation2], %s405
        // Predicated region
        $region61: #{tpu_custom_call.1} parent=59 // pred_check
          %p407 = pneg %p51
        $region62: #{tpu_custom_call.1} parent=59 // pred_check_branch
          %409 = sbr.rel (%p407) target = $region64
        $region63: #{tpu_custom_call.1} parent=59 // pred_region
          %411 = dma.done %s403, 128
        $region64: #{tpu_custom_call.1} parent=59 // pred_fallthru
          _
        // Predicated region
        $region65: #{tpu_custom_call.1} parent=59 // pred_check
          %p412 = pneg %p72
        $region66: #{tpu_custom_call.1} parent=59 // pred_check_branch
          %414 = sbr.rel (%p412) target = $region68
        $region67: #{tpu_custom_call.1} parent=59 // pred_region
          %416 = dma.done [#allocation6], 1536
        $region68: #{tpu_custom_call.1} parent=59 // pred_fallthru
          _
        // Predicated region
        $region69: #{tpu_custom_call.1} parent=59 // pred_check
          %p417 = pneg %p93
        $region70: #{tpu_custom_call.1} parent=59 // pred_check_branch
          %419 = sbr.rel (%p417) target = $region72
        $region71: #{tpu_custom_call.1} parent=59 // pred_region
          %421 = dma.done [#allocation6], 48
        $region72: #{tpu_custom_call.1} parent=59 // pred_fallthru
          _
        // Predicated region
        $region73: #{tpu_custom_call.1} parent=59 // pred_check
          %p422 = pneg %p114
        $region74: #{tpu_custom_call.1} parent=59 // pred_check_branch
          %424 = sbr.rel (%p422) target = $region76
        $region75: #{tpu_custom_call.1} parent=59 // pred_region
          %426 = dma.done [#allocation9], 2048
        $region76: #{tpu_custom_call.1} parent=59 // pred_fallthru
          _
        // Predicated region
        $region77: #{tpu_custom_call.1} parent=59 // pred_check
          %p427 = pneg %p156
        $region78: #{tpu_custom_call.1} parent=59 // pred_check_branch
          %429 = sbr.rel (%p427) target = $region80
        $region79: #{tpu_custom_call.1} parent=59 // pred_region
          %431 = dma.done [#allocation9], 2048
        $region80: #{tpu_custom_call.1} parent=59 // pred_fallthru
          _
        // Predicated region
        $region81: #{tpu_custom_call.1} parent=59 // pred_check
          %p432 = pneg %p198
        $region82: #{tpu_custom_call.1} parent=59 // pred_check_branch
          %434 = sbr.rel (%p432) target = $region84
        $region83: #{tpu_custom_call.1} parent=59 // pred_region
          %436 = dma.done [#allocation12], 2048
        $region84: #{tpu_custom_call.1} parent=59 // pred_fallthru
          _
        // Predicated region
        $region85: #{tpu_custom_call.1} parent=59 // pred_check
          %p437 = pneg %p219
        $region86: #{tpu_custom_call.1} parent=59 // pred_check_branch
          %439 = sbr.rel (%p437) target = $region88
        $region87: #{tpu_custom_call.1} parent=59 // pred_region
          %441 = dma.done [#allocation12], 2048
        $region88: #{tpu_custom_call.1} parent=59 // pred_fallthru
          _
        %s442 = sand.u32 %s38, 1
        %s443 = scalar_lea.sflag [#allocation3], %s442
        %s444 = sand.u32 %s38, 1
        %s445 = smul.addr %s444, 8
        %s446 = scalar_lea.vmem [#allocation2], %s445
        %p447 = pneg %p51
        %p448 = pneg %p48
        %p449 = pneg %p72
        %p450 = pneg %p69
        %p451 = pneg %p93
        %p452 = pneg %p90
        %p453 = pneg %p114
        %p454 = pneg %p111
        %p455 = pneg %p135
        %p456 = pneg %p132
        %p457 = pneg %p156
        %p458 = pneg %p153
        %p459 = pneg %p177
        %p460 = pneg %p174
        %p461 = pneg %p198
        %p462 = pneg %p195
        %p463 = pneg %p219
        %p464 = pneg %p216
        %p465 = pneg %p240
        %p466 = pneg %p237
        %p467 = pneg %p266
        %p468 = pneg %p263
        %s469 = sand.u32 %s253, 1
        %s470 = scalar_lea.sflag [#allocation4], %s469
        %s471 = sand.u32 %s253, 1
        %s472 = smul.addr %s471, 16
        %s473 = scalar_lea.vmem [#allocation14], %s472
        %v474 = vld [vmem:[%s406] sm:$0xff]
        %v475 = vld [vmem:[#allocation5] sm:$0xff]
        %v476 = vld [vmem:[#allocation5 + $0x8] sm:$0xff]
        %v477 = vld [vmem:[#allocation5 + $0x10] sm:$0xff]
        %v478 = vld [vmem:[#allocation5 + $0x18] sm:$0xff]
        %v479 = vld [vmem:[#allocation5 + $0x20] sm:$0xff]
        %v480 = vld [vmem:[#allocation5 + $0x28] sm:$0xff]
        %v481 = vld [vmem:[#allocation5 + $0x30] sm:$0xff]
        %v482 = vld [vmem:[#allocation5 + $0x38] sm:$0xff]
        %v483 = vld [vmem:[#allocation5 + $0x40] sm:$0xff]
        %v484 = vld [vmem:[#allocation5 + $0x48] sm:$0xff]
        %v485 = vld [vmem:[#allocation5 + $0x50] sm:$0xff]
        %v486 = vld [vmem:[#allocation5 + $0x58] sm:$0xff]
        %v487 = vld [vmem:[#allocation7] sm:$0x7]
        %v489 = vperm.slane %v487, 0
        %v490 = vperm.slane %v487, 1
        %v491 = vperm.slane %v487, 2
        %vm495 = vcmask 261120
        %v497 = vsel %vm495, %v474, 0
        %499 = vmatpush.msra.mxu0 0.0
        %500 = vmatpush.msra.mxu0 0.0
        %501 = vmatpush.msra.mxu0 0.0
        %502 = vmatpush.msra.mxu0 0.0
        %503 = vmatpush.msra.mxu0 0.0
        %504 = vmatpush.msra.mxu0 0.0
        %505 = vmatpush.msra.mxu0 0.0
        %506 = vmatpush.msra.mxu0 0.0
        %507 = vmatpush.msra.mxu0 0.0
        %508 = vmatpush.msra.mxu0 0.0
        %509 = vmatpush.msra.mxu0 0.0
        %510 = vmatpush.msra.mxu0 0.0
        %511 = vmatpush.msra.mxu0 %v484
        %512 = vmatpush.msra.mxu0 %v481
        %513 = vmatpush.msra.mxu0 %v478
        %514 = vmatpush.msra.mxu0 %v475
        %515 = vmatmul.f32.gmra.mxu0 %v497
        %v516 = vpop.f32.mrf.mxu0
        %v517 = vadd.f32 %v489, %v516
        %518 = vdwg.mxu0
        %519 = vmatpush.msra.mxu0 0.0
        %520 = vmatpush.msra.mxu0 0.0
        %521 = vmatpush.msra.mxu0 0.0
        %522 = vmatpush.msra.mxu0 0.0
        %523 = vmatpush.msra.mxu0 0.0
        %524 = vmatpush.msra.mxu0 0.0
        %525 = vmatpush.msra.mxu0 0.0
        %526 = vmatpush.msra.mxu0 0.0
        %527 = vmatpush.msra.mxu0 0.0
        %528 = vmatpush.msra.mxu0 0.0
        %529 = vmatpush.msra.mxu0 0.0
        %530 = vmatpush.msra.mxu0 0.0
        %531 = vmatpush.msra.mxu0 %v485
        %532 = vmatpush.msra.mxu0 %v482
        %533 = vmatpush.msra.mxu0 %v479
        %534 = vmatpush.msra.mxu0 %v476
        %535 = vmatmul.f32.gmra.mxu0 %v497
        %v536 = vpop.f32.mrf.mxu0
        %v537 = vadd.f32 %v490, %v536
        %538 = vdwg.mxu0
        %539 = vmatpush.msra.mxu0 0.0
        %540 = vmatpush.msra.mxu0 0.0
        %541 = vmatpush.msra.mxu0 0.0
        %542 = vmatpush.msra.mxu0 0.0
        %543 = vmatpush.msra.mxu0 0.0
        %544 = vmatpush.msra.mxu0 0.0
        %545 = vmatpush.msra.mxu0 0.0
        %546 = vmatpush.msra.mxu0 0.0
        %547 = vmatpush.msra.mxu0 0.0
        %548 = vmatpush.msra.mxu0 0.0
        %549 = vmatpush.msra.mxu0 0.0
        %550 = vmatpush.msra.mxu0 0.0
        %551 = vmatpush.msra.mxu0 %v486
        %552 = vmatpush.msra.mxu0 %v483
        %553 = vmatpush.msra.mxu0 %v480
        %554 = vmatpush.msra.mxu0 %v477
        %555 = vmatmul.f32.gmra.mxu0 %v497
        %v556 = vpop.f32.mrf.mxu0
        %v557 = vadd.f32 %v491, %v556
        %558 = vdwg.mxu0
        %559 = vst [vmem:[%s473] sm:$0xff] %v557
        %v560 = vmax.f32 %v517, 0.0
        %v561 = vmax.f32 %v537, 0.0
        %v562 = vld [vmem:[#allocation8] sm:$0xff]
        %v563 = vld [vmem:[#allocation8 + $0x8] sm:$0xff]
        %v564 = vld [vmem:[#allocation8 + $0x10] sm:$0xff]
        %v565 = vld [vmem:[#allocation8 + $0x18] sm:$0xff]
        %v566 = vld [vmem:[#allocation8 + $0x20] sm:$0xff]
        %v567 = vld [vmem:[#allocation8 + $0x28] sm:$0xff]
        %v568 = vld [vmem:[#allocation8 + $0x30] sm:$0xff]
        %v569 = vld [vmem:[#allocation8 + $0x38] sm:$0xff]
        %v570 = vld [vmem:[#allocation8 + $0x40] sm:$0xff]
        %v571 = vld [vmem:[#allocation8 + $0x48] sm:$0xff]
        %v572 = vld [vmem:[#allocation8 + $0x50] sm:$0xff]
        %v573 = vld [vmem:[#allocation8 + $0x58] sm:$0xff]
        %v574 = vld [vmem:[#allocation8 + $0x60] sm:$0xff]
        %v575 = vld [vmem:[#allocation8 + $0x68] sm:$0xff]
        %v576 = vld [vmem:[#allocation8 + $0x70] sm:$0xff]
        %v577 = vld [vmem:[#allocation8 + $0x78] sm:$0xff]
        %v578 = vld [vmem:[%s4] sm:$0x1]
        %v580 = vperm.slane %v578, 0
        %582 = vmatpush.msra.mxu0 %v577
        %583 = vmatpush.msra.mxu0 %v576
        %584 = vmatpush.msra.mxu0 %v575
        %585 = vmatpush.msra.mxu0 %v574
        %586 = vmatpush.msra.mxu0 %v573
        %587 = vmatpush.msra.mxu0 %v572
        %588 = vmatpush.msra.mxu0 %v571
        %589 = vmatpush.msra.mxu0 %v570
        %590 = vmatpush.msra.mxu0 %v569
        %591 = vmatpush.msra.mxu0 %v568
        %592 = vmatpush.msra.mxu0 %v567
        %593 = vmatpush.msra.mxu0 %v566
        %594 = vmatpush.msra.mxu0 %v565
        %595 = vmatpush.msra.mxu0 %v564
        %596 = vmatpush.msra.mxu0 %v563
        %597 = vmatpush.msra.mxu0 %v562
        %598 = vmatmul.f32.gmra.mxu0 %v560
        %v599 = vpop.f32.mrf.mxu0
        %v600 = vadd.f32 %v580, %v599
        %601 = vdwg.mxu0
        %v602 = vmax.f32 %v600, 0.0
        %v603 = vld [vmem:[#allocation10] sm:$0xff]
        %v604 = vld [vmem:[#allocation10 + $0x8] sm:$0xff]
        %v605 = vld [vmem:[#allocation10 + $0x10] sm:$0xff]
        %v606 = vld [vmem:[#allocation10 + $0x18] sm:$0xff]
        %v607 = vld [vmem:[#allocation10 + $0x20] sm:$0xff]
        %v608 = vld [vmem:[#allocation10 + $0x28] sm:$0xff]
        %v609 = vld [vmem:[#allocation10 + $0x30] sm:$0xff]
        %v610 = vld [vmem:[#allocation10 + $0x38] sm:$0xff]
        %v611 = vld [vmem:[#allocation10 + $0x40] sm:$0xff]
        %v612 = vld [vmem:[#allocation10 + $0x48] sm:$0xff]
        %v613 = vld [vmem:[#allocation10 + $0x50] sm:$0xff]
        %v614 = vld [vmem:[#allocation10 + $0x58] sm:$0xff]
        %v615 = vld [vmem:[#allocation10 + $0x60] sm:$0xff]
        %v616 = vld [vmem:[#allocation10 + $0x68] sm:$0xff]
        %v617 = vld [vmem:[#allocation10 + $0x70] sm:$0xff]
        %v618 = vld [vmem:[#allocation10 + $0x78] sm:$0xff]
        %v619 = vld [vmem:[%s6] sm:$0x1]
        %v621 = vperm.slane %v619, 0
        %623 = vmatpush.msra.mxu0 %v618
        %624 = vmatpush.msra.mxu0 %v617
        %625 = vmatpush.msra.mxu0 %v616
        %626 = vmatpush.msra.mxu0 %v615
        %627 = vmatpush.msra.mxu0 %v614
        %628 = vmatpush.msra.mxu0 %v613
        %629 = vmatpush.msra.mxu0 %v612
        %630 = vmatpush.msra.mxu0 %v611
        %631 = vmatpush.msra.mxu0 %v610
        %632 = vmatpush.msra.mxu0 %v609
        %633 = vmatpush.msra.mxu0 %v608
        %634 = vmatpush.msra.mxu0 %v607
        %635 = vmatpush.msra.mxu0 %v606
        %636 = vmatpush.msra.mxu0 %v605
        %637 = vmatpush.msra.mxu0 %v604
        %638 = vmatpush.msra.mxu0 %v603
        %639 = vmatmul.f32.gmra.mxu0 %v561
        %v640 = vpop.f32.mrf.mxu0
        %v641 = vadd.f32 %v621, %v640
        %642 = vdwg.mxu0
        %v643 = vmax.f32 %v641, 0.0
        %v644 = vld [vmem:[#allocation11] sm:$0xff]
        %v645 = vld [vmem:[#allocation11 + $0x8] sm:$0xff]
        %v646 = vld [vmem:[#allocation11 + $0x10] sm:$0xff]
        %v647 = vld [vmem:[#allocation11 + $0x18] sm:$0xff]
        %v648 = vld [vmem:[#allocation11 + $0x20] sm:$0xff]
        %v649 = vld [vmem:[#allocation11 + $0x28] sm:$0xff]
        %v650 = vld [vmem:[#allocation11 + $0x30] sm:$0xff]
        %v651 = vld [vmem:[#allocation11 + $0x38] sm:$0xff]
        %v652 = vld [vmem:[#allocation11 + $0x40] sm:$0xff]
        %v653 = vld [vmem:[#allocation11 + $0x48] sm:$0xff]
        %v654 = vld [vmem:[#allocation11 + $0x50] sm:$0xff]
        %v655 = vld [vmem:[#allocation11 + $0x58] sm:$0xff]
        %v656 = vld [vmem:[#allocation11 + $0x60] sm:$0xff]
        %v657 = vld [vmem:[#allocation11 + $0x68] sm:$0xff]
        %v658 = vld [vmem:[#allocation11 + $0x70] sm:$0xff]
        %v659 = vld [vmem:[#allocation11 + $0x78] sm:$0xff]
        %v660 = vld [vmem:[#allocation13] sm:$0xff]
        %v661 = vld [vmem:[#allocation13 + $0x8] sm:$0xff]
        %v662 = vld [vmem:[#allocation13 + $0x10] sm:$0xff]
        %v663 = vld [vmem:[#allocation13 + $0x18] sm:$0xff]
        %v664 = vld [vmem:[#allocation13 + $0x20] sm:$0xff]
        %v665 = vld [vmem:[#allocation13 + $0x28] sm:$0xff]
        %v666 = vld [vmem:[#allocation13 + $0x30] sm:$0xff]
        %v667 = vld [vmem:[#allocation13 + $0x38] sm:$0xff]
        %v668 = vld [vmem:[#allocation13 + $0x40] sm:$0xff]
        %v669 = vld [vmem:[#allocation13 + $0x48] sm:$0xff]
        %v670 = vld [vmem:[#allocation13 + $0x50] sm:$0xff]
        %v671 = vld [vmem:[#allocation13 + $0x58] sm:$0xff]
        %v672 = vld [vmem:[#allocation13 + $0x60] sm:$0xff]
        %v673 = vld [vmem:[#allocation13 + $0x68] sm:$0xff]
        %v674 = vld [vmem:[#allocation13 + $0x70] sm:$0xff]
        %v675 = vld [vmem:[#allocation13 + $0x78] sm:$0xff]
        %676 = vmatpush.msra.mxu0 %v675
        %677 = vmatpush.msra.mxu0 %v674
        %678 = vmatpush.msra.mxu0 %v673
        %679 = vmatpush.msra.mxu0 %v672
        %680 = vmatpush.msra.mxu0 %v671
        %681 = vmatpush.msra.mxu0 %v670
        %682 = vmatpush.msra.mxu0 %v669
        %683 = vmatpush.msra.mxu0 %v668
        %684 = vmatpush.msra.mxu0 %v667
        %685 = vmatpush.msra.mxu0 %v666
        %686 = vmatpush.msra.mxu0 %v665
        %687 = vmatpush.msra.mxu0 %v664
        %688 = vmatpush.msra.mxu0 %v663
        %689 = vmatpush.msra.mxu0 %v662
        %690 = vmatpush.msra.mxu0 %v661
        %691 = vmatpush.msra.mxu0 %v660
        %692 = vmatmul.f32.gmra.mxu0 %v643
        %v693 = vpop.f32.mrf.mxu0
        %v694 = vadd.f32 0.0, %v693
        %695 = vdwg.mxu0
        %696 = vmatpush.msra.mxu0 %v659
        %697 = vmatpush.msra.mxu0 %v658
        %698 = vmatpush.msra.mxu0 %v657
        %699 = vmatpush.msra.mxu0 %v656
        %700 = vmatpush.msra.mxu0 %v655
        %701 = vmatpush.msra.mxu0 %v654
        %702 = vmatpush.msra.mxu0 %v653
        %703 = vmatpush.msra.mxu0 %v652
        %704 = vmatpush.msra.mxu0 %v651
        %705 = vmatpush.msra.mxu0 %v650
        %706 = vmatpush.msra.mxu0 %v649
        %707 = vmatpush.msra.mxu0 %v648
        %708 = vmatpush.msra.mxu0 %v647
        %709 = vmatpush.msra.mxu0 %v646
        %710 = vmatpush.msra.mxu0 %v645
        %711 = vmatpush.msra.mxu0 %v644
        %712 = vmatmul.f32.gmra.mxu0 %v602
        %v713 = vpop.f32.mrf.mxu0
        %v714 = vadd.f32 %v694, %v713
        %715 = vdwg.mxu0
        %v716 = vld [vmem:[%s9] sm:$0x1]
        %v718 = vperm.slane %v716, 0
        %v720 = vadd.f32 %v714, %v718
        %v721 = vxor.u32 %v720, 2147483648
        %v722 = vmul.f32 %v721, 1.442695
        %v723 = vpow.pop %v722
        %v724 = vadd.f32 %v723, 1.0
        %v725 = vrcp.pop %v724
        %v726 = vmul.f32 %v724, %v725
        %v727 = vsub.f32 1.0, %v726
        %v728 = vmul.f32 %v725, %v727
        %v729 = vadd.f32 %v725, %v728
        %vm730 = vweird.f32 %v724
        %vm731 = vweird.f32 %v725
        %vm732 = vmor %vm730, %vm731
        %v733 = vsel %vm732, %v725, %v729
        %v734 = vand.u32 2147483647, %v724
        %vm735 = vcmp.eq.f32.partialorder %v734, 8.507059e+37
        %v736 = vand.u32 %v724, 2147483648
        %v737 = vor.u32 1.1754944e-38, %v736
        %v738 = vsel %vm735, %v737, %v733
        %v739 = vmul.f32 1.0, %v738
        %740 = vst [vmem:[%s473 + $0x8] sm:$0xff] %v739
        %s741 = sand.u32 %s253, 1
        %s742 = scalar_lea.sflag [#allocation4], %s741
        %s743 = sand.u32 %s253, 1
        %s744 = smul.addr %s743, 16
        %s745 = scalar_lea.vmem [#allocation14], %s744
        // Predicated region
        $region89: #{tpu_custom_call.1} parent=59 // pred_check
          %p746 = pneg %p263
        $region90: #{tpu_custom_call.1} parent=59 // pred_check_branch
          %748 = sbr.rel (%p746) target = $region92
        $region91: #{tpu_custom_call.1} parent=59 // pred_region
          %750 = vsyncadd %s742, 0
          %s751 = smul.addr %s30, 2
          %s752 = smul.addr %s751, 8
          %s753 = scalar_lea.hbm %s10, %s752
          %s755 = sshll.u32 %s745, 4
          %s756 = int_to_ptr.vmem [resolvable:$true] %s755
          %s757 = sshll.u32 %s753, 4
          %s758 = int_to_ptr.hbm [resolvable:$true] %s757
          %760 = dma.vmem_to_hbm [thread:$0]  %s756, 256, %s758, %s742
        $region92: #{tpu_custom_call.1} parent=59 // pred_fallthru
          _
      $region60: #{tpu_custom_call.1} parent=5 // pred_fallthru
        _
      %p761 = scmp.le.s32.totalorder 2, %s25
      // Predicated region
      $region93: #{tpu_custom_call.1} parent=5 // pred_check
        %p762 = pneg %p761
      $region94: #{tpu_custom_call.1} parent=5 // pred_check_branch
        %764 = sbr.rel (%p762) target = $region96
      $region95: #{tpu_custom_call.1} parent=5 // pred_region
        %s765 = ssub.s32 %s25, 2
        // Predicated region
        $region97: #{tpu_custom_call.1} parent=95 // pred_check
          %p766 = pneg %p269
        $region98: #{tpu_custom_call.1} parent=95 // pred_check_branch
          %768 = sbr.rel (%p766) target = $region100
        $region99: #{tpu_custom_call.1} parent=95 // pred_region
          %s769 = sand.u32 %s254, 1
          %s770 = scalar_lea.sflag [#allocation4], %s769
          %s771 = sand.u32 %s254, 1
          %s772 = smul.addr %s771, 16
          %s773 = scalar_lea.vmem [#allocation14], %s772
          %775 = dma.done %s770, 256
        $region100: #{tpu_custom_call.1} parent=95 // pred_fallthru
          _
      $region96: #{tpu_custom_call.1} parent=5 // pred_fallthru
        _
    $region6: #{tpu_custom_call.1} parent=1 // loop_footer
      %s29 = sadd.s32 1, %s25
    $region7: #{tpu_custom_call.1} parent=1 // loop_footer_branch
      %24 = sbr.rel target = $region3
    $region8: #{tpu_custom_call.1} parent=1 // loop_exit
      _
    %776 = vsyncpa [#allocation3], 1
    %s777 = scalar_lea.sflag [#allocation3], 1
    %778 = vsyncpa %s777, 1
    %779 = vsyncpa [#allocation6], 1
    %780 = vsyncpa [#allocation9], 1
    %781 = vsyncpa [#allocation12], 1
    %782 = vsyncpa [#allocation4], 1
    %s783 = scalar_lea.sflag [#allocation4], 1
    %784 = vsyncpa %s783, 1

// kernel: tpu_custom_call.1
$region0: #{tpu_custom_call.1}
  #allocation0 [shape = 'u32[]', space=smem, size = 0x4, offset = 0x4, fixed_abs, tag = 'smem constant byte address 0x4 - core index']
  #allocation1 [shape = 'u32[72,128]{1,0:T(1,128)}', space=vmem, size = 0x9000, scoped, tag = 'internal scratch']
  %s0 = inlined_call_operand.hbm [shape: f32[16,32], index: 0, kind: input, shape index: {}]
  %s1 = inlined_call_operand.hbm [shape: f32[32,384], index: 1, kind: input, shape index: {}]
  %s2 = inlined_call_operand.hbm [shape: f32[1,384], index: 2, kind: input, shape index: {}]
  %s3 = inlined_call_operand.hbm [shape: f32[128,128], index: 3, kind: input, shape index: {}]
  %s4 = inlined_call_operand.vmem [shape: f32[1,128], index: 4, kind: input, shape index: {}]
  %s5 = inlined_call_operand.hbm [shape: f32[128,128], index: 5, kind: input, shape index: {}]
  %s6 = inlined_call_operand.vmem [shape: f32[1,128], index: 6, kind: input, shape index: {}]
  %s7 = inlined_call_operand.hbm [shape: f32[128,128], index: 7, kind: input, shape index: {}]
  %s8 = inlined_call_operand.hbm [shape: f32[128,128], index: 8, kind: input, shape index: {}]
  %s9 = inlined_call_operand.vmem [shape: f32[1,128], index: 9, kind: input, shape index: {}]
  %s10 = inlined_call_operand.hbm [shape: f32[16,256], index: 10, kind: output, shape index: {}]
  %s11 = sld [smem:[#allocation0]]
  $region101: #{tpu_custom_call.1} parent=0
    _
  %s13 = ssub.s32 1, %s11
  %s14 = scalar_select 0, %s13, %s11
  $region1: #{tpu_custom_call.1} parent=0
    #allocation2 [shape = 'u8[8192]{0}', space=vmem, size = 0x2000, scoped, tag = 'input window, operand 0']
    #allocation3 [shape = 's32[2]{0}', space=sflag, size = 0x8, scoped, tag = 'scoped memory for tpu_custom_call.1']
    #allocation4 [shape = 's32[2]{0}', space=sflag, size = 0x8, scoped, tag = 'scoped memory for tpu_custom_call.1']
    #allocation5 [shape = 'u8[49152]{0}', space=vmem, size = 0xc000, scoped, tag = 'input window, operand 1, single buffered']
    #allocation6 [shape = 's32[1]{0}', space=sflag, size = 0x4, scoped, tag = 'scoped memory for tpu_custom_call.1']
    #allocation7 [shape = 'u8[1536]{0}', space=vmem, size = 0x800, scoped, tag = 'input window, operand 2, single buffered']
    #allocation8 [shape = 'u8[65536]{0}', space=vmem, size = 0x10000, scoped, tag = 'input window, operand 3, single buffered']
    #allocation9 [shape = 's32[1]{0}', space=sflag, size = 0x4, scoped, tag = 'scoped memory for tpu_custom_call.1']
    #allocation10 [shape = 'u8[65536]{0}', space=vmem, size = 0x10000, scoped, tag = 'input window, operand 5, single buffered']
    #allocation11 [shape = 'u8[65536]{0}', space=vmem, size = 0x10000, scoped, tag = 'input window, operand 7, single buffered']
    #allocation12 [shape = 's32[1]{0}', space=sflag, size = 0x4, scoped, tag = 'scoped memory for tpu_custom_call.1']
    #allocation13 [shape = 'u8[65536]{0}', space=vmem, size = 0x10000, scoped, tag = 'input window, operand 8, single buffered']
    #allocation14 [shape = 'u8[16384]{0}', space=vmem, size = 0x4000, scoped, tag = 'output window, operand 0']
    %15 = vsyncpa [#allocation3], 0
    %s16 = scalar_lea.sflag [#allocation3], 1
    %17 = vsyncpa %s16, 0
    %18 = vsyncpa [#allocation6], 0
    %19 = vsyncpa [#allocation9], 0
    %20 = vsyncpa [#allocation12], 0
    %21 = vsyncpa [#allocation4], 0
    %s22 = scalar_lea.sflag [#allocation4], 1
    %23 = vsyncpa %s22, 0
    loop: start=0, step=1, limit=4
    $region2: #{tpu_custom_call.1} parent=1 // loop_pre_header
      _
    $region3: #{tpu_custom_call.1} parent=1 // loop_header
      %s25 = sphi 0, %s29
      %p26 = scmp.ge.s32.totalorder %s25, 4
      %s35 = sphi 0, %s37
      %s38 = sphi 0, %s35
      %s39 = sphi 0, %s38
      %s55 = sphi 0, %s39
      %s59 = sphi 0, %s59
      %s61 = sphi 0, %s59
      %s62 = sphi 0, %s61
      %s76 = sphi 0, %s62
      %s80 = sphi 0, %s80
      %s82 = sphi 0, %s80
      %s83 = sphi 0, %s82
      %s97 = sphi 0, %s83
      %s101 = sphi 0, %s101
      %s103 = sphi 0, %s101
      %s104 = sphi 0, %s103
      %s118 = sphi 0, %s104
      %s122 = sphi 0, %s122
      %s124 = sphi 0, %s122
      %s125 = sphi 0, %s124
      %s139 = sphi 0, %s125
      %s143 = sphi 0, %s143
      %s145 = sphi 0, %s143
      %s146 = sphi 0, %s145
      %s160 = sphi 0, %s146
      %s164 = sphi 0, %s164
      %s166 = sphi 0, %s164
      %s167 = sphi 0, %s166
      %s181 = sphi 0, %s167
      %s185 = sphi 0, %s185
      %s187 = sphi 0, %s185
      %s188 = sphi 0, %s187
      %s202 = sphi 0, %s188
      %s206 = sphi 0, %s206
      %s208 = sphi 0, %s206
      %s209 = sphi 0, %s208
      %s223 = sphi 0, %s209
      %s227 = sphi 0, %s227
      %s229 = sphi 0, %s227
      %s230 = sphi 0, %s229
      %s244 = sphi 0, %s230
      %s250 = sphi 0, %s252
      %s253 = sphi 0, %s250
      %s254 = sphi 0, %s253
      %s270 = sphi 0, %s254
    $region4: #{tpu_custom_call.1} parent=1 // loop_header_branch
      %28 = sbr.rel (%p26) target = $region8
    $region5: #{tpu_custom_call.1} parent=1 // loop_body
      %s30 = ssub.s32 %s25, 1
      %s31 = ssub.s32 %s25, 2
      %s32 = sadd.s32 %s25, 1
      %s33 = ssub.s32 %s25, %s32
      %p34 = scmp.eq.s32.totalorder %s33, 0
      %s36 = sadd.s32 %s35, 1
      %s37 = scalar_select %p34, %s35, %s36
      %p40 = pneg %p34
      %p41 = scmp.eq.s32.totalorder %s25, 1
      %p42 = por %p40, %p41
      %p43 = scmp.ne.s32.totalorder %s35, %s38
      %p44 = scmp.eq.s32.totalorder %s25, 0
      %p45 = por %p43, %p44
      %p46 = scmp.ne.s32.totalorder %s35, %s38
      %p47 = scmp.eq.s32.totalorder %s30, 1
      %p48 = por %p46, %p47
      %p49 = scmp.ne.s32.totalorder %s38, %s39
      %p50 = scmp.eq.s32.totalorder %s30, 0
      %p51 = por %p49, %p50
      %p52 = scmp.ne.s32.totalorder %s38, %s39
      %p53 = scmp.eq.s32.totalorder %s31, 1
      %p54 = por %p52, %p53
      %p56 = scmp.ne.s32.totalorder %s39, %s55
      %p57 = scmp.eq.s32.totalorder %s31, 0
      %p58 = por %p56, %p57
      %s60 = sadd.s32 %s59, 1
      %p63 = scmp.eq.s32.totalorder %s25, 1
      %p64 = scmp.ne.s32.totalorder %s59, %s61
      %p65 = scmp.eq.s32.totalorder %s25, 0
      %p66 = por %p64, %p65
      %p67 = scmp.ne.s32.totalorder %s59, %s61
      %p68 = scmp.eq.s32.totalorder %s30, 1
      %p69 = por %p67, %p68
      %p70 = scmp.ne.s32.totalorder %s61, %s62
      %p71 = scmp.eq.s32.totalorder %s30, 0
      %p72 = por %p70, %p71
      %p73 = scmp.ne.s32.totalorder %s61, %s62
      %p74 = scmp.eq.s32.totalorder %s31, 1
      %p75 = por %p73, %p74
      %p77 = scmp.ne.s32.totalorder %s62, %s76
      %p78 = scmp.eq.s32.totalorder %s31, 0
      %p79 = por %p77, %p78
      %s81 = sadd.s32 %s80, 1
      %p84 = scmp.eq.s32.totalorder %s25, 1
      %p85 = scmp.ne.s32.totalorder %s80, %s82
      %p86 = scmp.eq.s32.totalorder %s25, 0
      %p87 = por %p85, %p86
      %p88 = scmp.ne.s32.totalorder %s80, %s82
      %p89 = scmp.eq.s32.totalorder %s30, 1
      %p90 = por %p88, %p89
      %p91 = scmp.ne.s32.totalorder %s82, %s83
      %p92 = scmp.eq.s32.totalorder %s30, 0
      %p93 = por %p91, %p92
      %p94 = scmp.ne.s32.totalorder %s82, %s83
      %p95 = scmp.eq.s32.totalorder %s31, 1
      %p96 = por %p94, %p95
      %p98 = scmp.ne.s32.totalorder %s83, %s97
      %p99 = scmp.eq.s32.totalorder %s31, 0
      %p100 = por %p98, %p99
      %s102 = sadd.s32 %s101, 1
      %p105 = scmp.eq.s32.totalorder %s25, 1
      %p106 = scmp.ne.s32.totalorder %s101, %s103
      %p107 = scmp.eq.s32.totalorder %s25, 0
      %p108 = por %p106, %p107
      %p109 = scmp.ne.s32.totalorder %s101, %s103
      %p110 = scmp.eq.s32.totalorder %s30, 1
      %p111 = por %p109, %p110
      %p112 = scmp.ne.s32.totalorder %s103, %s104
      %p113 = scmp.eq.s32.totalorder %s30, 0
      %p114 = por %p112, %p113
      %p115 = scmp.ne.s32.totalorder %s103, %s104
      %p116 = scmp.eq.s32.totalorder %s31, 1
      %p117 = por %p115, %p116
      %p119 = scmp.ne.s32.totalorder %s104, %s118
      %p120 = scmp.eq.s32.totalorder %s31, 0
      %p121 = por %p119, %p120
      %s123 = sadd.s32 %s122, 1
      %p126 = scmp.eq.s32.totalorder %s25, 1
      %p127 = scmp.ne.s32.totalorder %s122, %s124
      %p128 = scmp.eq.s32.totalorder %s25, 0
      %p129 = por %p127, %p128
      %p130 = scmp.ne.s32.totalorder %s122, %s124
      %p131 = scmp.eq.s32.totalorder %s30, 1
      %p132 = por %p130, %p131
      %p133 = scmp.ne.s32.totalorder %s124, %s125
      %p134 = scmp.eq.s32.totalorder %s30, 0
      %p135 = por %p133, %p134
      %p136 = scmp.ne.s32.totalorder %s124, %s125
      %p137 = scmp.eq.s32.totalorder %s31, 1
      %p138 = por %p136, %p137
      %p140 = scmp.ne.s32.totalorder %s125, %s139
      %p141 = scmp.eq.s32.totalorder %s31, 0
      %p142 = por %p140, %p141
      %s144 = sadd.s32 %s143, 1
      %p147 = scmp.eq.s32.totalorder %s25, 1
      %p148 = scmp.ne.s32.totalorder %s143, %s145
      %p149 = scmp.eq.s32.totalorder %s25, 0
      %p150 = por %p148, %p149
      %p151 = scmp.ne.s32.totalorder %s143, %s145
      %p152 = scmp.eq.s32.totalorder %s30, 1
      %p153 = por %p151, %p152
      %p154 = scmp.ne.s32.totalorder %s145, %s146
      %p155 = scmp.eq.s32.totalorder %s30, 0
      %p156 = por %p154, %p155
      %p157 = scmp.ne.s32.totalorder %s145, %s146
      %p158 = scmp.eq.s32.totalorder %s31, 1
      %p159 = por %p157, %p158
      %p161 = scmp.ne.s32.totalorder %s146, %s160
      %p162 = scmp.eq.s32.totalorder %s31, 0
      %p163 = por %p161, %p162
      %s165 = sadd.s32 %s164, 1
      %p168 = scmp.eq.s32.totalorder %s25, 1
      %p169 = scmp.ne.s32.totalorder %s164, %s166
      %p170 = scmp.eq.s32.totalorder %s25, 0
      %p171 = por %p169, %p170
      %p172 = scmp.ne.s32.totalorder %s164, %s166
      %p173 = scmp.eq.s32.totalorder %s30, 1
      %p174 = por %p172, %p173
      %p175 = scmp.ne.s32.totalorder %s166, %s167
      %p176 = scmp.eq.s32.totalorder %s30, 0
      %p177 = por %p175, %p176
      %p178 = scmp.ne.s32.totalorder %s166, %s167
      %p179 = scmp.eq.s32.totalorder %s31, 1
      %p180 = por %p178, %p179
      %p182 = scmp.ne.s32.totalorder %s167, %s181
      %p183 = scmp.eq.s32.totalorder %s31, 0
      %p184 = por %p182, %p183
      %s186 = sadd.s32 %s185, 1
      %p189 = scmp.eq.s32.totalorder %s25, 1
      %p190 = scmp.ne.s32.totalorder %s185, %s187
      %p191 = scmp.eq.s32.totalorder %s25, 0
      %p192 = por %p190, %p191
      %p193 = scmp.ne.s32.totalorder %s185, %s187
      %p194 = scmp.eq.s32.totalorder %s30, 1
      %p195 = por %p193, %p194
      %p196 = scmp.ne.s32.totalorder %s187, %s188
      %p197 = scmp.eq.s32.totalorder %s30, 0
      %p198 = por %p196, %p197
      %p199 = scmp.ne.s32.totalorder %s187, %s188
      %p200 = scmp.eq.s32.totalorder %s31, 1
      %p201 = por %p199, %p200
      %p203 = scmp.ne.s32.totalorder %s188, %s202
      %p204 = scmp.eq.s32.totalorder %s31, 0
      %p205 = por %p203, %p204
      %s207 = sadd.s32 %s206, 1
      %p210 = scmp.eq.s32.totalorder %s25, 1
      %p211 = scmp.ne.s32.totalorder %s206, %s208
      %p212 = scmp.eq.s32.totalorder %s25, 0
      %p213 = por %p211, %p212
      %p214 = scmp.ne.s32.totalorder %s206, %s208
      %p215 = scmp.eq.s32.totalorder %s30, 1
      %p216 = por %p214, %p215
      %p217 = scmp.ne.s32.totalorder %s208, %s209
      %p218 = scmp.eq.s32.totalorder %s30, 0
      %p219 = por %p217, %p218
      %p220 = scmp.ne.s32.totalorder %s208, %s209
      %p221 = scmp.eq.s32.totalorder %s31, 1
      %p222 = por %p220, %p221
      %p224 = scmp.ne.s32.totalorder %s209, %s223
      %p225 = scmp.eq.s32.totalorder %s31, 0
      %p226 = por %p224, %p225
      %s228 = sadd.s32 %s227, 1
      %p231 = scmp.eq.s32.totalorder %s25, 1
      %p232 = scmp.ne.s32.totalorder %s227, %s229
      %p233 = scmp.eq.s32.totalorder %s25, 0
      %p234 = por %p232, %p233
      %p235 = scmp.ne.s32.totalorder %s227, %s229
      %p236 = scmp.eq.s32.totalorder %s30, 1
      %p237 = por %p235, %p236
      %p238 = scmp.ne.s32.totalorder %s229, %s230
      %p239 = scmp.eq.s32.totalorder %s30, 0
      %p240 = por %p238, %p239
      %p241 = scmp.ne.s32.totalorder %s229, %s230
      %p242 = scmp.eq.s32.totalorder %s31, 1
      %p243 = por %p241, %p242
      %p245 = scmp.ne.s32.totalorder %s230, %s244
      %p246 = scmp.eq.s32.totalorder %s31, 0
      %p247 = por %p245, %p246
      %s248 = ssub.s32 %s25, %s32
      %p249 = scmp.eq.s32.totalorder %s248, 0
      %s251 = sadd.s32 %s250, 1
      %s252 = scalar_select %p249, %s250, %s251
      %p255 = pneg %p249
      %p256 = scmp.eq.s32.totalorder %s25, 1
      %p257 = por %p255, %p256
      %p258 = scmp.ne.s32.totalorder %s250, %s253
      %p259 = scmp.eq.s32.totalorder %s25, 0
      %p260 = por %p258, %p259
      %p261 = scmp.ne.s32.totalorder %s250, %s253
      %p262 = scmp.eq.s32.totalorder %s30, 1
      %p263 = por %p261, %p262
      %p264 = scmp.ne.s32.totalorder %s253, %s254
      %p265 = scmp.eq.s32.totalorder %s30, 0
      %p266 = por %p264, %p265
      %p267 = scmp.ne.s32.totalorder %s253, %s254
      %p268 = scmp.eq.s32.totalorder %s31, 1
      %p269 = por %p267, %p268
      %p271 = scmp.ne.s32.totalorder %s254, %s270
      %p272 = scmp.eq.s32.totalorder %s31, 0
      %p273 = por %p271, %p272
      %p274 = scmp.le.s32.totalorder 1, %s25
      %p275 = scmp.lt.s32.totalorder %s25, 3
      %p276 = pnand %p274, %p275
      %p277 = pneg %p276
      // Predicated region
      $region9: #{tpu_custom_call.1} parent=5 // pred_check
        _
      $region10: #{tpu_custom_call.1} parent=5 // pred_check_branch
        %279 = sbr.rel (%p276) target = $region12
      $region11: #{tpu_custom_call.1} parent=5 // pred_region
        %s280 = ssub.s32 %s25, 1
        // Predicated region
        $region13: #{tpu_custom_call.1} parent=11 // pred_check
          %p281 = pneg %p72
        $region14: #{tpu_custom_call.1} parent=11 // pred_check_branch
          %283 = sbr.rel (%p281) target = $region16
        $region15: #{tpu_custom_call.1} parent=11 // pred_region
          %285 = vsyncadd [#allocation6], 0
          %s286 = sshll.u32 %s1, 4
          %s287 = int_to_ptr.hbm [resolvable:$true] %s286
          %s288 = sshll.u32 [#allocation5], 4
          %s289 = int_to_ptr.vmem [resolvable:$true] %s288
          %294 = dma.hbm_to_vmem [thread:$0]  %s287, 1536, %s289, [#allocation6], 384, 384, 24
        $region16: #{tpu_custom_call.1} parent=11 // pred_fallthru
          _
        // Predicated region
        $region17: #{tpu_custom_call.1} parent=11 // pred_check
          %p295 = pneg %p93
        $region18: #{tpu_custom_call.1} parent=11 // pred_check_branch
          %297 = sbr.rel (%p295) target = $region20
        $region19: #{tpu_custom_call.1} parent=11 // pred_region
          %299 = vsyncadd [#allocation6], 0
          %s301 = sshll.u32 %s2, 4
          %s302 = int_to_ptr.hbm [resolvable:$true] %s301
          %s303 = sshll.u32 [#allocation7], 4
          %s304 = int_to_ptr.vmem [resolvable:$true] %s303
          %306 = dma.hbm_to_vmem [thread:$0]  %s302, 48, %s304, [#allocation6]
        $region20: #{tpu_custom_call.1} parent=11 // pred_fallthru
          _
        // Predicated region
        $region21: #{tpu_custom_call.1} parent=11 // pred_check
          %p307 = pneg %p114
        $region22: #{tpu_custom_call.1} parent=11 // pred_check_branch
          %309 = sbr.rel (%p307) target = $region24
        $region23: #{tpu_custom_call.1} parent=11 // pred_region
          %311 = vsyncadd [#allocation9], 0
          %s312 = sshll.u32 %s3, 4
          %s313 = int_to_ptr.hbm [resolvable:$true] %s312
          %s314 = sshll.u32 [#allocation8], 4
          %s315 = int_to_ptr.vmem [resolvable:$true] %s314
          %320 = dma.hbm_to_vmem [thread:$0]  %s313, 2048, %s315, [#allocation9], 128, 128, 8
        $region24: #{tpu_custom_call.1} parent=11 // pred_fallthru
          _
        // Predicated region
        $region25: #{tpu_custom_call.1} parent=11 // pred_check
          %p321 = pneg %p135
        $region26: #{tpu_custom_call.1} parent=11 // pred_check_branch
          %323 = sbr.rel (%p321) target = $region28
        $region27: #{tpu_custom_call.1} parent=11 // pred_region
          _
        $region28: #{tpu_custom_call.1} parent=11 // pred_fallthru
          _
        // Predicated region
        $region29: #{tpu_custom_call.1} parent=11 // pred_check
          %p324 = pneg %p156
        $region30: #{tpu_custom_call.1} parent=11 // pred_check_branch
          %326 = sbr.rel (%p324) target = $region32
        $region31: #{tpu_custom_call.1} parent=11 // pred_region
          %328 = vsyncadd [#allocation9], 0
          %s329 = sshll.u32 %s5, 4
          %s330 = int_to_ptr.hbm [resolvable:$true] %s329
          %s331 = sshll.u32 [#allocation10], 4
          %s332 = int_to_ptr.vmem [resolvable:$true] %s331
          %337 = dma.hbm_to_vmem [thread:$0]  %s330, 2048, %s332, [#allocation9], 128, 128, 8
        $region32: #{tpu_custom_call.1} parent=11 // pred_fallthru
          _
        // Predicated region
        $region33: #{tpu_custom_call.1} parent=11 // pred_check
          %p338 = pneg %p177
        $region34: #{tpu_custom_call.1} parent=11 // pred_check_branch
          %340 = sbr.rel (%p338) target = $region36
        $region35: #{tpu_custom_call.1} parent=11 // pred_region
          _
        $region36: #{tpu_custom_call.1} parent=11 // pred_fallthru
          _
        // Predicated region
        $region37: #{tpu_custom_call.1} parent=11 // pred_check
          %p341 = pneg %p198
        $region38: #{tpu_custom_call.1} parent=11 // pred_check_branch
          %343 = sbr.rel (%p341) target = $region40
        $region39: #{tpu_custom_call.1} parent=11 // pred_region
          %345 = vsyncadd [#allocation12], 0
          %s346 = sshll.u32 %s7, 4
          %s347 = int_to_ptr.hbm [resolvable:$true] %s346
          %s348 = sshll.u32 [#allocation11], 4
          %s349 = int_to_ptr.vmem [resolvable:$true] %s348
          %354 = dma.hbm_to_vmem [thread:$0]  %s347, 2048, %s349, [#allocation12], 128, 128, 8
        $region40: #{tpu_custom_call.1} parent=11 // pred_fallthru
          _
        // Predicated region
        $region41: #{tpu_custom_call.1} parent=11 // pred_check
          %p355 = pneg %p219
        $region42: #{tpu_custom_call.1} parent=11 // pred_check_branch
          %357 = sbr.rel (%p355) target = $region44
        $region43: #{tpu_custom_call.1} parent=11 // pred_region
          %359 = vsyncadd [#allocation12], 0
          %s360 = sshll.u32 %s8, 4
          %s361 = int_to_ptr.hbm [resolvable:$true] %s360
          %s362 = sshll.u32 [#allocation13], 4
          %s363 = int_to_ptr.vmem [resolvable:$true] %s362
          %368 = dma.hbm_to_vmem [thread:$0]  %s361, 2048, %s363, [#allocation12], 128, 128, 8
        $region44: #{tpu_custom_call.1} parent=11 // pred_fallthru
          _
        // Predicated region
        $region45: #{tpu_custom_call.1} parent=11 // pred_check
          %p369 = pneg %p240
        $region46: #{tpu_custom_call.1} parent=11 // pred_check_branch
          %371 = sbr.rel (%p369) target = $region48
        $region47: #{tpu_custom_call.1} parent=11 // pred_region
          _
        $region48: #{tpu_custom_call.1} parent=11 // pred_fallthru
          _
      $region12: #{tpu_custom_call.1} parent=5 // pred_fallthru
        _
      %p372 = scmp.lt.s32.totalorder %s25, 2
      // Predicated region
      $region49: #{tpu_custom_call.1} parent=5 // pred_check
        %p373 = pneg %p372
      $region50: #{tpu_custom_call.1} parent=5 // pred_check_branch
        %375 = sbr.rel (%p373) target = $region52
      $region51: #{tpu_custom_call.1} parent=5 // pred_region
        // Predicated region
        $region53: #{tpu_custom_call.1} parent=51 // pred_check
          %p376 = pneg %p45
        $region54: #{tpu_custom_call.1} parent=51 // pred_check_branch
          %378 = sbr.rel (%p376) target = $region56
        $region55: #{tpu_custom_call.1} parent=51 // pred_region
          %s379 = sand.u32 %s35, 1
          %s380 = scalar_lea.sflag [#allocation3], %s379
          %s381 = sand.u32 %s35, 1
          %s382 = smul.addr %s381, 8
          %s383 = scalar_lea.vmem [#allocation2], %s382
          %385 = vsyncadd %s380, 0
          %s386 = smul.addr %s25, 8
          %s387 = scalar_lea.hbm %s0, %s386
          %s389 = sshll.u32 %s387, 4
          %s390 = int_to_ptr.hbm [resolvable:$true] %s389
          %s391 = sshll.u32 %s383, 4
          %s392 = int_to_ptr.vmem [resolvable:$true] %s391
          %394 = dma.hbm_to_vmem [thread:$0]  %s390, 128, %s392, %s380
        $region56: #{tpu_custom_call.1} parent=51 // pred_fallthru
          _
      $region52: #{tpu_custom_call.1} parent=5 // pred_fallthru
        _
      %p395 = scmp.le.s32.totalorder 1, %s25
      %p396 = scmp.lt.s32.totalorder %s25, 3
      %p397 = pnand %p395, %p396
      %p398 = pneg %p397
      // Predicated region
      $region57: #{tpu_custom_call.1} parent=5 // pred_check
        _
      $region58: #{tpu_custom_call.1} parent=5 // pred_check_branch
        %400 = sbr.rel (%p397) target = $region60
      $region59: #{tpu_custom_call.1} parent=5 // pred_region
        %s401 = ssub.s32 %s25, 1
        %s402 = sand.u32 %s38, 1
        %s403 = scalar_lea.sflag [#allocation3], %s402
        %s404 = sand.u32 %s38, 1
        %s405 = smul.addr %s404, 8
        %s406 = scalar_lea.vmem [#allocation2], %s405
        // Predicated region
        $region61: #{tpu_custom_call.1} parent=59 // pred_check
          %p407 = pneg %p51
        $region62: #{tpu_custom_call.1} parent=59 // pred_check_branch
          %409 = sbr.rel (%p407) target = $region64
        $region63: #{tpu_custom_call.1} parent=59 // pred_region
          %411 = dma.done %s403, 128
        $region64: #{tpu_custom_call.1} parent=59 // pred_fallthru
          _
        // Predicated region
        $region65: #{tpu_custom_call.1} parent=59 // pred_check
          %p412 = pneg %p72
        $region66: #{tpu_custom_call.1} parent=59 // pred_check_branch
          %414 = sbr.rel (%p412) target = $region68
        $region67: #{tpu_custom_call.1} parent=59 // pred_region
          %416 = dma.done [#allocation6], 1536
        $region68: #{tpu_custom_call.1} parent=59 // pred_fallthru
          _
        // Predicated region
        $region69: #{tpu_custom_call.1} parent=59 // pred_check
          %p417 = pneg %p93
        $region70: #{tpu_custom_call.1} parent=59 // pred_check_branch
          %419 = sbr.rel (%p417) target = $region72
        $region71: #{tpu_custom_call.1} parent=59 // pred_region
          %421 = dma.done [#allocation6], 48
        $region72: #{tpu_custom_call.1} parent=59 // pred_fallthru
          _
        // Predicated region
        $region73: #{tpu_custom_call.1} parent=59 // pred_check
          %p422 = pneg %p114
        $region74: #{tpu_custom_call.1} parent=59 // pred_check_branch
          %424 = sbr.rel (%p422) target = $region76
        $region75: #{tpu_custom_call.1} parent=59 // pred_region
          %426 = dma.done [#allocation9], 2048
        $region76: #{tpu_custom_call.1} parent=59 // pred_fallthru
          _
        // Predicated region
        $region77: #{tpu_custom_call.1} parent=59 // pred_check
          %p427 = pneg %p156
        $region78: #{tpu_custom_call.1} parent=59 // pred_check_branch
          %429 = sbr.rel (%p427) target = $region80
        $region79: #{tpu_custom_call.1} parent=59 // pred_region
          %431 = dma.done [#allocation9], 2048
        $region80: #{tpu_custom_call.1} parent=59 // pred_fallthru
          _
        // Predicated region
        $region81: #{tpu_custom_call.1} parent=59 // pred_check
          %p432 = pneg %p198
        $region82: #{tpu_custom_call.1} parent=59 // pred_check_branch
          %434 = sbr.rel (%p432) target = $region84
        $region83: #{tpu_custom_call.1} parent=59 // pred_region
          %436 = dma.done [#allocation12], 2048
        $region84: #{tpu_custom_call.1} parent=59 // pred_fallthru
          _
        // Predicated region
        $region85: #{tpu_custom_call.1} parent=59 // pred_check
          %p437 = pneg %p219
        $region86: #{tpu_custom_call.1} parent=59 // pred_check_branch
          %439 = sbr.rel (%p437) target = $region88
        $region87: #{tpu_custom_call.1} parent=59 // pred_region
          %441 = dma.done [#allocation12], 2048
        $region88: #{tpu_custom_call.1} parent=59 // pred_fallthru
          _
        %s442 = sand.u32 %s38, 1
        %s443 = scalar_lea.sflag [#allocation3], %s442
        %s444 = sand.u32 %s38, 1
        %s445 = smul.addr %s444, 8
        %s446 = scalar_lea.vmem [#allocation2], %s445
        %p447 = pneg %p51
        %p448 = pneg %p48
        %p449 = pneg %p72
        %p450 = pneg %p69
        %p451 = pneg %p93
        %p452 = pneg %p90
        %p453 = pneg %p114
        %p454 = pneg %p111
        %p455 = pneg %p135
        %p456 = pneg %p132
        %p457 = pneg %p156
        %p458 = pneg %p153
        %p459 = pneg %p177
        %p460 = pneg %p174
        %p461 = pneg %p198
        %p462 = pneg %p195
        %p463 = pneg %p219
        %p464 = pneg %p216
        %p465 = pneg %p240
        %p466 = pneg %p237
        %p467 = pneg %p266
        %p468 = pneg %p263
        %s469 = sand.u32 %s253, 1
        %s470 = scalar_lea.sflag [#allocation4], %s469
        %s471 = sand.u32 %s253, 1
        %s472 = smul.addr %s471, 16
        %s473 = scalar_lea.vmem [#allocation14], %s472
        %v474 = vld [vmem:[%s406] sm:$0xff]
        %v475 = vld [vmem:[#allocation5] sm:$0xff]
        %v476 = vld [vmem:[#allocation5 + $0x8] sm:$0xff]
        %v477 = vld [vmem:[#allocation5 + $0x10] sm:$0xff]
        %v478 = vld [vmem:[#allocation5 + $0x18] sm:$0xff]
        %v479 = vld [vmem:[#allocation5 + $0x20] sm:$0xff]
        %v480 = vld [vmem:[#allocation5 + $0x28] sm:$0xff]
        %v481 = vld [vmem:[#allocation5 + $0x30] sm:$0xff]
        %v482 = vld [vmem:[#allocation5 + $0x38] sm:$0xff]
        %v483 = vld [vmem:[#allocation5 + $0x40] sm:$0xff]
        %v484 = vld [vmem:[#allocation5 + $0x48] sm:$0xff]
        %v485 = vld [vmem:[#allocation5 + $0x50] sm:$0xff]
        %v486 = vld [vmem:[#allocation5 + $0x58] sm:$0xff]
        %v487 = vld [vmem:[#allocation7] sm:$0x7]
        %v489 = vperm.slane %v487, 0
        %v490 = vperm.slane %v487, 1
        %v491 = vperm.slane %v487, 2
        %vm495 = vcmask 261120
        %v497 = vsel %vm495, %v474, 0
        %499 = vmatpush.msra.mxu0 0.0
        %500 = vmatpush.msra.mxu0 0.0
        %501 = vmatpush.msra.mxu0 0.0
        %502 = vmatpush.msra.mxu0 0.0
        %503 = vmatpush.msra.mxu0 0.0
        %504 = vmatpush.msra.mxu0 0.0
        %505 = vmatpush.msra.mxu0 0.0
        %506 = vmatpush.msra.mxu0 0.0
        %507 = vmatpush.msra.mxu0 0.0
        %508 = vmatpush.msra.mxu0 0.0
        %509 = vmatpush.msra.mxu0 0.0
        %510 = vmatpush.msra.mxu0 0.0
        %511 = vmatpush.msra.mxu0 %v484
        %512 = vmatpush.msra.mxu0 %v481
        %513 = vmatpush.msra.mxu0 %v478
        %514 = vmatpush.msra.mxu0 %v475
        %515 = vmatmul.f32.gmra.mxu0 %v497
        %v516 = vpop.f32.mrf.mxu0
        %v517 = vadd.f32 %v489, %v516
        %518 = vdwg.mxu0
        %519 = vmatpush.msra.mxu0 0.0
        %520 = vmatpush.msra.mxu0 0.0
        %521 = vmatpush.msra.mxu0 0.0
        %522 = vmatpush.msra.mxu0 0.0
        %523 = vmatpush.msra.mxu0 0.0
        %524 = vmatpush.msra.mxu0 0.0
        %525 = vmatpush.msra.mxu0 0.0
        %526 = vmatpush.msra.mxu0 0.0
        %527 = vmatpush.msra.mxu0 0.0
        %528 = vmatpush.msra.mxu0 0.0
        %529 = vmatpush.msra.mxu0 0.0
        %530 = vmatpush.msra.mxu0 0.0
        %531 = vmatpush.msra.mxu0 %v485
        %532 = vmatpush.msra.mxu0 %v482
        %533 = vmatpush.msra.mxu0 %v479
        %534 = vmatpush.msra.mxu0 %v476
        %535 = vmatmul.f32.gmra.mxu0 %v497
        %v536 = vpop.f32.mrf.mxu0
        %v537 = vadd.f32 %v490, %v536
        %538 = vdwg.mxu0
        %539 = vmatpush.msra.mxu0 0.0
        %540 = vmatpush.msra.mxu0 0.0
        %541 = vmatpush.msra.mxu0 0.0
        %542 = vmatpush.msra.mxu0 0.0
        %543 = vmatpush.msra.mxu0 0.0
        %544 = vmatpush.msra.mxu0 0.0
        %545 = vmatpush.msra.mxu0 0.0
        %546 = vmatpush.msra.mxu0 0.0
        %547 = vmatpush.msra.mxu0 0.0
        %548 = vmatpush.msra.mxu0 0.0
        %549 = vmatpush.msra.mxu0 0.0
        %550 = vmatpush.msra.mxu0 0.0
        %551 = vmatpush.msra.mxu0 %v486
        %552 = vmatpush.msra.mxu0 %v483
        %553 = vmatpush.msra.mxu0 %v480
        %554 = vmatpush.msra.mxu0 %v477
        %555 = vmatmul.f32.gmra.mxu0 %v497
        %v556 = vpop.f32.mrf.mxu0
        %v557 = vadd.f32 %v491, %v556
        %558 = vdwg.mxu0
        %559 = vst [vmem:[%s473] sm:$0xff] %v557
        %v560 = vmax.f32 %v517, 0.0
        %v561 = vmax.f32 %v537, 0.0
        %v562 = vld [vmem:[#allocation8] sm:$0xff]
        %v563 = vld [vmem:[#allocation8 + $0x8] sm:$0xff]
        %v564 = vld [vmem:[#allocation8 + $0x10] sm:$0xff]
        %v565 = vld [vmem:[#allocation8 + $0x18] sm:$0xff]
        %v566 = vld [vmem:[#allocation8 + $0x20] sm:$0xff]
        %v567 = vld [vmem:[#allocation8 + $0x28] sm:$0xff]
        %v568 = vld [vmem:[#allocation8 + $0x30] sm:$0xff]
        %v569 = vld [vmem:[#allocation8 + $0x38] sm:$0xff]
        %v570 = vld [vmem:[#allocation8 + $0x40] sm:$0xff]
        %v571 = vld [vmem:[#allocation8 + $0x48] sm:$0xff]
        %v572 = vld [vmem:[#allocation8 + $0x50] sm:$0xff]
        %v573 = vld [vmem:[#allocation8 + $0x58] sm:$0xff]
        %v574 = vld [vmem:[#allocation8 + $0x60] sm:$0xff]
        %v575 = vld [vmem:[#allocation8 + $0x68] sm:$0xff]
        %v576 = vld [vmem:[#allocation8 + $0x70] sm:$0xff]
        %v577 = vld [vmem:[#allocation8 + $0x78] sm:$0xff]
        %v578 = vld [vmem:[%s4] sm:$0x1]
        %v580 = vperm.slane %v578, 0
        %582 = vmatpush.msra.mxu0 %v577
        %583 = vmatpush.msra.mxu0 %v576
        %584 = vmatpush.msra.mxu0 %v575
        %585 = vmatpush.msra.mxu0 %v574
        %586 = vmatpush.msra.mxu0 %v573
        %587 = vmatpush.msra.mxu0 %v572
        %588 = vmatpush.msra.mxu0 %v571
        %589 = vmatpush.msra.mxu0 %v570
        %590 = vmatpush.msra.mxu0 %v569
        %591 = vmatpush.msra.mxu0 %v568
        %592 = vmatpush.msra.mxu0 %v567
        %593 = vmatpush.msra.mxu0 %v566
        %594 = vmatpush.msra.mxu0 %v565
        %595 = vmatpush.msra.mxu0 %v564
        %596 = vmatpush.msra.mxu0 %v563
        %597 = vmatpush.msra.mxu0 %v562
        %598 = vmatmul.f32.gmra.mxu0 %v560
        %v599 = vpop.f32.mrf.mxu0
        %v600 = vadd.f32 %v580, %v599
        %601 = vdwg.mxu0
        %v602 = vmax.f32 %v600, 0.0
        %v603 = vld [vmem:[#allocation10] sm:$0xff]
        %v604 = vld [vmem:[#allocation10 + $0x8] sm:$0xff]
        %v605 = vld [vmem:[#allocation10 + $0x10] sm:$0xff]
        %v606 = vld [vmem:[#allocation10 + $0x18] sm:$0xff]
        %v607 = vld [vmem:[#allocation10 + $0x20] sm:$0xff]
        %v608 = vld [vmem:[#allocation10 + $0x28] sm:$0xff]
        %v609 = vld [vmem:[#allocation10 + $0x30] sm:$0xff]
        %v610 = vld [vmem:[#allocation10 + $0x38] sm:$0xff]
        %v611 = vld [vmem:[#allocation10 + $0x40] sm:$0xff]
        %v612 = vld [vmem:[#allocation10 + $0x48] sm:$0xff]
        %v613 = vld [vmem:[#allocation10 + $0x50] sm:$0xff]
        %v614 = vld [vmem:[#allocation10 + $0x58] sm:$0xff]
        %v615 = vld [vmem:[#allocation10 + $0x60] sm:$0xff]
        %v616 = vld [vmem:[#allocation10 + $0x68] sm:$0xff]
        %v617 = vld [vmem:[#allocation10 + $0x70] sm:$0xff]
        %v618 = vld [vmem:[#allocation10 + $0x78] sm:$0xff]
        %v619 = vld [vmem:[%s6] sm:$0x1]
        %v621 = vperm.slane %v619, 0
        %623 = vmatpush.msra.mxu0 %v618
        %624 = vmatpush.msra.mxu0 %v617
        %625 = vmatpush.msra.mxu0 %v616
        %626 = vmatpush.msra.mxu0 %v615
        %627 = vmatpush.msra.mxu0 %v614
        %628 = vmatpush.msra.mxu0 %v613
        %629 = vmatpush.msra.mxu0 %v612
        %630 = vmatpush.msra.mxu0 %v611
        %631 = vmatpush.msra.mxu0 %v610
        %632 = vmatpush.msra.mxu0 %v609
        %633 = vmatpush.msra.mxu0 %v608
        %634 = vmatpush.msra.mxu0 %v607
        %635 = vmatpush.msra.mxu0 %v606
        %636 = vmatpush.msra.mxu0 %v605
        %637 = vmatpush.msra.mxu0 %v604
        %638 = vmatpush.msra.mxu0 %v603
        %639 = vmatmul.f32.gmra.mxu0 %v561
        %v640 = vpop.f32.mrf.mxu0
        %v641 = vadd.f32 %v621, %v640
        %642 = vdwg.mxu0
        %v643 = vmax.f32 %v641, 0.0
        %v644 = vld [vmem:[#allocation11] sm:$0xff]
        %v645 = vld [vmem:[#allocation11 + $0x8] sm:$0xff]
        %v646 = vld [vmem:[#allocation11 + $0x10] sm:$0xff]
        %v647 = vld [vmem:[#allocation11 + $0x18] sm:$0xff]
        %v648 = vld [vmem:[#allocation11 + $0x20] sm:$0xff]
        %v649 = vld [vmem:[#allocation11 + $0x28] sm:$0xff]
        %v650 = vld [vmem:[#allocation11 + $0x30] sm:$0xff]
        %v651 = vld [vmem:[#allocation11 + $0x38] sm:$0xff]
        %v652 = vld [vmem:[#allocation11 + $0x40] sm:$0xff]
        %v653 = vld [vmem:[#allocation11 + $0x48] sm:$0xff]
        %v654 = vld [vmem:[#allocation11 + $0x50] sm:$0xff]
        %v655 = vld [vmem:[#allocation11 + $0x58] sm:$0xff]
        %v656 = vld [vmem:[#allocation11 + $0x60] sm:$0xff]
        %v657 = vld [vmem:[#allocation11 + $0x68] sm:$0xff]
        %v658 = vld [vmem:[#allocation11 + $0x70] sm:$0xff]
        %v659 = vld [vmem:[#allocation11 + $0x78] sm:$0xff]
        %v660 = vld [vmem:[#allocation13] sm:$0xff]
        %v661 = vld [vmem:[#allocation13 + $0x8] sm:$0xff]
        %v662 = vld [vmem:[#allocation13 + $0x10] sm:$0xff]
        %v663 = vld [vmem:[#allocation13 + $0x18] sm:$0xff]
        %v664 = vld [vmem:[#allocation13 + $0x20] sm:$0xff]
        %v665 = vld [vmem:[#allocation13 + $0x28] sm:$0xff]
        %v666 = vld [vmem:[#allocation13 + $0x30] sm:$0xff]
        %v667 = vld [vmem:[#allocation13 + $0x38] sm:$0xff]
        %v668 = vld [vmem:[#allocation13 + $0x40] sm:$0xff]
        %v669 = vld [vmem:[#allocation13 + $0x48] sm:$0xff]
        %v670 = vld [vmem:[#allocation13 + $0x50] sm:$0xff]
        %v671 = vld [vmem:[#allocation13 + $0x58] sm:$0xff]
        %v672 = vld [vmem:[#allocation13 + $0x60] sm:$0xff]
        %v673 = vld [vmem:[#allocation13 + $0x68] sm:$0xff]
        %v674 = vld [vmem:[#allocation13 + $0x70] sm:$0xff]
        %v675 = vld [vmem:[#allocation13 + $0x78] sm:$0xff]
        %676 = vmatpush.msra.mxu0 %v675
        %677 = vmatpush.msra.mxu0 %v674
        %678 = vmatpush.msra.mxu0 %v673
        %679 = vmatpush.msra.mxu0 %v672
        %680 = vmatpush.msra.mxu0 %v671
        %681 = vmatpush.msra.mxu0 %v670
        %682 = vmatpush.msra.mxu0 %v669
        %683 = vmatpush.msra.mxu0 %v668
        %684 = vmatpush.msra.mxu0 %v667
        %685 = vmatpush.msra.mxu0 %v666
        %686 = vmatpush.msra.mxu0 %v665
        %687 = vmatpush.msra.mxu0 %v664
        %688 = vmatpush.msra.mxu0 %v663
        %689 = vmatpush.msra.mxu0 %v662
        %690 = vmatpush.msra.mxu0 %v661
        %691 = vmatpush.msra.mxu0 %v660
        %692 = vmatmul.f32.gmra.mxu0 %v643
        %v693 = vpop.f32.mrf.mxu0
        %v694 = vadd.f32 0.0, %v693
        %695 = vdwg.mxu0
        %696 = vmatpush.msra.mxu0 %v659
        %697 = vmatpush.msra.mxu0 %v658
        %698 = vmatpush.msra.mxu0 %v657
        %699 = vmatpush.msra.mxu0 %v656
        %700 = vmatpush.msra.mxu0 %v655
        %701 = vmatpush.msra.mxu0 %v654
        %702 = vmatpush.msra.mxu0 %v653
        %703 = vmatpush.msra.mxu0 %v652
        %704 = vmatpush.msra.mxu0 %v651
        %705 = vmatpush.msra.mxu0 %v650
        %706 = vmatpush.msra.mxu0 %v649
        %707 = vmatpush.msra.mxu0 %v648
        %708 = vmatpush.msra.mxu0 %v647
        %709 = vmatpush.msra.mxu0 %v646
        %710 = vmatpush.msra.mxu0 %v645
        %711 = vmatpush.msra.mxu0 %v644
        %712 = vmatmul.f32.gmra.mxu0 %v602
        %v713 = vpop.f32.mrf.mxu0
        %v714 = vadd.f32 %v694, %v713
        %715 = vdwg.mxu0
        %v716 = vld [vmem:[%s9] sm:$0x1]
        %v718 = vperm.slane %v716, 0
        %v720 = vadd.f32 %v714, %v718
        %v721 = vxor.u32 %v720, 2147483648
        %v722 = vmul.f32 %v721, 1.442695
        %v723 = vpow.pop %v722
        %v724 = vadd.f32 %v723, 1.0
        %v725 = vrcp.pop %v724
        %v726 = vmul.f32 %v724, %v725
        %v727 = vsub.f32 1.0, %v726
        %v728 = vmul.f32 %v725, %v727
        %v729 = vadd.f32 %v725, %v728
        %vm730 = vweird.f32 %v724
        %vm731 = vweird.f32 %v725
        %vm732 = vmor %vm730, %vm731
        %v733 = vsel %vm732, %v725, %v729
        %v734 = vand.u32 2147483647, %v724
        %vm735 = vcmp.eq.f32.partialorder %v734, 8.507059e+37
        %v736 = vand.u32 %v724, 2147483648
        %v737 = vor.u32 1.1754944e-38, %v736
        %v738 = vsel %vm735, %v737, %v733
        %v739 = vmul.f32 1.0, %v738
        %740 = vst [vmem:[%s473 + $0x8] sm:$0xff] %v739
        %s741 = sand.u32 %s253, 1
        %s742 = scalar_lea.sflag [#allocation4], %s741
        %s743 = sand.u32 %s253, 1
        %s744 = smul.addr %s743, 16
        %s745 = scalar_lea.vmem [#allocation14], %s744
        // Predicated region
        $region89: #{tpu_custom_call.1} parent=59 // pred_check
          %p746 = pneg %p263
        $region90: #{tpu_custom_call.1} parent=59 // pred_check_branch
          %748 = sbr.rel (%p746) target = $region92
        $region91: #{tpu_custom_call.1} parent=59 // pred_region
          %750 = vsyncadd %s742, 0
          %s751 = smul.addr %s30, 2
          %s752 = smul.addr %s751, 8
          %s753 = scalar_lea.hbm %s10, %s752
          %s755 = sshll.u32 %s745, 4
          %s756 = int_to_ptr.vmem [resolvable:$true] %s755
          %s757 = sshll.u32 %s753, 4
          %s758 = int_to_ptr.hbm [resolvable:$true] %s757
          %760 = dma.vmem_to_hbm [thread:$0]  %s756, 256, %s758, %s742
        $region92: #{tpu_custom_call.1} parent=59 // pred_fallthru
          _
      $region60: #{tpu_custom_call.1} parent=5 // pred_fallthru
        _
      %p761 = scmp.le.s32.totalorder 2, %s25
      // Predicated region
      $region93: #{tpu_custom_call.1} parent=5 // pred_check
        %p762 = pneg %p761
      $region94: #{tpu_custom_call.1} parent=5 // pred_check_branch
        %764 = sbr.rel (%p762) target = $region96
      $region95: #{tpu_custom_call.1} parent=5 // pred_region
        %s765 = ssub.s32 %s25, 2
        // Predicated region
        $region97: #{tpu_custom_call.1} parent=95 // pred_check
          %p766 = pneg %p269
        $region98: #{tpu_custom_call.1} parent=95 // pred_check_branch
          %768 = sbr.rel (%p766) target = $region100
        $region99: #{tpu_custom_call.1} parent=95 // pred_region
          %s769 = sand.u32 %s254, 1
          %s770 = scalar_lea.sflag [#allocation4], %s769
          %s771 = sand.u32 %s254, 1
          %s772 = smul.addr %s771, 16
          %s773 = scalar_lea.vmem [#allocation14], %s772
          %775 = dma.done %s770, 256
        $region100: #{tpu_custom_call.1} parent=95 // pred_fallthru
          _
      $region96: #{tpu_custom_call.1} parent=5 // pred_fallthru
        _
    $region6: #{tpu_custom_call.1} parent=1 // loop_footer
      %s29 = sadd.s32 1, %s25
    $region7: #{tpu_custom_call.1} parent=1 // loop_footer_branch
      %24 = sbr.rel target = $region3
    $region8: #{tpu_custom_call.1} parent=1 // loop_exit
      _
    %776 = vsyncpa [#allocation3], 1
    %s777 = scalar_lea.sflag [#allocation3], 1
    %778 = vsyncpa %s777, 1
    %779 = vsyncpa [#allocation6], 1
    %780 = vsyncpa [#allocation9], 1
    %781 = vsyncpa [#allocation12], 1
    %782 = vsyncpa [#allocation4], 1
    %s783 = scalar_lea.sflag [#allocation4], 1
    %784 = vsyncpa %s783, 1

</llo_original>
